<compile_context>
chip_gen: v6e
topology: v6e:2x2x1
jax: 0.10.0
libtpu: 0.0.40
codegen_flags: <defaults>
</compile_context>

<pallas_src>
import jax
import jax.numpy as jnp
from jax import lax
from jax.experimental import pallas as pl
from jax.experimental.pallas import tpu as pltpu

N_ATOMS_PER_RESD = 14
N_BINS = 18
DIST_MIN = 3.375
DIST_MAX = 21.375
BIN_WID = (DIST_MAX - DIST_MIN) / N_BINS
LN_EPS = 1e-5

_PAIR_VMEM_BUDGET = 24 * 1024 * 1024   # budget for the 3 pair arrays x 2 pipeline buffers
_PAIR_VMEM_LIMIT = 48 * 1024 * 1024    # scoped VMEM limit for the pair kernel (<= v7x physical)


def _layer_norm(x, w, b):
    """LayerNorm over the last axis (fp32 math), matching nn.LayerNorm(eps=1e-5)."""
    x32 = x.astype(jnp.float32)
    mean = jnp.mean(x32, axis=-1, keepdims=True)
    var = jnp.mean(jnp.square(x32 - mean), axis=-1, keepdims=True)
    return (x32 - mean) * lax.rsqrt(var + LN_EPS) * w.astype(jnp.float32) + b.astype(jnp.float32)


# ---------------------------------------------------------------------------
# Kernel 1: MSA row-0 update  ->  mfea[:, 0] += LayerNorm(rc_sfea)
# Output is aliased to the full mfea buffer; only the (n, 0) block is written,
# so rows 1..K-1 are preserved in place (no full-K HBM copy).
# ---------------------------------------------------------------------------
def _msa_kernel(mfea_ref, sfea_ref, w_ref, b_ref, out_ref):
    ln = _layer_norm(sfea_ref[0], w_ref[0], b_ref[0])                 # (L, D_m) fp32
    out_ref[0, 0] = (mfea_ref[0, 0].astype(jnp.float32) + ln).astype(out_ref.dtype)


# ---------------------------------------------------------------------------
# Kernel 2: pair-feature update, row-tiled over L.
#   out = pfea + LayerNorm(rc_pfea) + Embed(bin(||CA_i - CA_j||))
# Pair tensors arrive flattened as (1, TL*L, Dp) 2D tiles.
# ---------------------------------------------------------------------------
def _pair_kernel(pfea_ref, rc_pfea_ref, cord_rows_ref, cord_t_ref,
                 w_ref, b_ref, emb_ref, out_ref):
    TL = cord_rows_ref.shape[1]
    L = cord_t_ref.shape[2]
    NB = emb_ref.shape[0]

    # --- pairwise CA distances for this row tile (direct differences, fp32) ---
    xi = cord_rows_ref[0].astype(jnp.float32)                         # (TL, 3)
    xj = cord_t_ref[0].astype(jnp.float32)                            # (3, L) pre-transposed
    d2 = jnp.zeros((TL, L), jnp.float32)
    for k in range(3):                                                # unrolled: 3 lane-dense FMAs
        diff = xi[:, k:k + 1] - xj[k:k + 1, :]                        # (TL, L)
        d2 = d2 + diff * diff
    dist = jnp.sqrt(d2)                                               # (TL, L)

    # --- distance binning: clip(floor((d - dmin)/w), 0, n_bins-1) ---
    idxs = jnp.clip(jnp.floor((dist - DIST_MIN) / BIN_WID), 0, NB - 1).astype(jnp.int32)

    # --- embedding lookup as one-hot @ table (MXU-friendly, avoids gather) ---
    # The reshape only merges leading dims (minor dim NB unchanged) -> layout-free for L%8==0.
    iota = lax.broadcasted_iota(jnp.int32, (TL, L, NB), 2)
    onehot = (idxs[:, :, None] == iota).astype(jnp.float32).reshape(TL * L, NB)
    emb = jnp.dot(onehot, emb_ref[...].astype(jnp.float32),
                  preferred_element_type=jnp.float32)                 # (TL*L, D_p)

    # --- LayerNorm on recycled pair features + final sum, all on 2D (rows, Dp) tiles ---
    ln = _layer_norm(rc_pfea_ref[0], w_ref[0], b_ref[0])              # (TL*L, D_p)
    out_ref[0] = (pfea_ref[0].astype(jnp.float32) + ln + emb).astype(out_ref.dtype)


def _choose_row_tile(L, Dp, itemsize, budget=_PAIR_VMEM_BUDGET):
    """Largest row tile TL (divisor of L, multiple of 8 or == L) whose double-buffered
    pair traffic (3 arrays x 2 buffers x TL*L*Dp) fits the VMEM budget."""
    if L % 8 != 0:
        return L
    candidates = [t for t in range(8, L + 1, 8) if L % t == 0]
    fits = [t for t in candidates if 6 * t * L * Dp * itemsize <= budget]
    return max(fits) if fits else min(candidates)


# ---------------------------------------------------------------------------
# Wrapper
# ---------------------------------------------------------------------------
def rc_embed_forward(mfea, pfea, params, rc_inputs=None, *, row_tile=None):
    N, K, L, Dm = mfea.shape
    Dp = pfea.shape[-1]
    dtype = mfea.dtype

    if rc_inputs is None:
        rc_inputs = {
            "sfea": jnp.zeros_like(mfea[:, 0]),
            "pfea": jnp.zeros_like(pfea),
            "cord": jnp.zeros((N, L, N_ATOMS_PER_RESD, 3), dtype=jnp.float32),
        }

    # Glue: CA-atom slice + pre-transposed coords (tiny; avoids in-kernel XLU transpose).
    cord_ca = rc_inputs["cord"][:, :, 1, :].astype(jnp.float32)       # (N, L, 3)
    cord_t = jnp.transpose(cord_ca, (0, 2, 1))                        # (N, 3, L)

    norm_m_w = params["norm_m_w"].reshape(1, Dm)
    norm_m_b = params["norm_m_b"].reshape(1, Dm)
    norm_p_w = params["norm_p_w"].reshape(1, Dp)
    norm_p_b = params["norm_p_b"].reshape(1, Dp)
    embed_w = params["embed_w"]                                       # (N_BINS, D_p)

    # ---- MSA row-0 update (in-place via input_output_aliases; rows 1..K-1 untouched) ----
    mfea_out = pl.pallas_call(
        _msa_kernel,
        out_shape=jax.ShapeDtypeStruct((N, K, L, Dm), dtype),
        grid=(N,),
        in_specs=[
            pl.BlockSpec((1, 1, L, Dm), lambda n: (n, 0, 0, 0)),
            pl.BlockSpec((1, L, Dm), lambda n: (n, 0, 0)),
            pl.BlockSpec((1, Dm), lambda n: (0, 0)),
            pl.BlockSpec((1, Dm), lambda n: (0, 0)),
        ],
        out_specs=pl.BlockSpec((1, 1, L, Dm), lambda n: (n, 0, 0, 0)),
        input_output_aliases={0: 0},
        compiler_params=pltpu.CompilerParams(dimension_semantics=("parallel",)),
    )(mfea, rc_inputs["sfea"], norm_m_w, norm_m_b)

    # ---- pair feature update, row-tiled over L ----
    if row_tile is None:
        row_tile = _choose_row_tile(L, Dp, jnp.dtype(dtype).itemsize)
    TL = int(row_tile)
    assert L % TL == 0 and (TL % 8 == 0 or TL == L), "invalid row tile"
    n_rt = L // TL

    # Free reshape of contiguous HBM: lane-dense (rows, Dp) 2D view for the kernel.
    pfea2d = pfea.reshape(N, L * L, Dp)
    rc_pfea2d = rc_inputs["pfea"].reshape(N, L * L, Dp)

    pfea_out2d = pl.pallas_call(
        _pair_kernel,
        out_shape=jax.ShapeDtypeStruct((N, L * L, Dp), dtype),
        grid=(N, n_rt),
        in_specs=[
            pl.BlockSpec((1, TL * L, Dp), lambda n, i: (n, i, 0)),    # pfea rows
            pl.BlockSpec((1, TL * L, Dp), lambda n, i: (n, i, 0)),    # rc pfea rows
            pl.BlockSpec((1, TL, 3), lambda n, i: (n, i, 0)),         # CA coords (row tile)
            pl.BlockSpec((1, 3, L), lambda n, i: (n, 0, 0)),          # CA coords^T (per sample)
            pl.BlockSpec((1, Dp), lambda n, i: (0, 0)),               # LN weight (resident)
            pl.BlockSpec((1, Dp), lambda n, i: (0, 0)),               # LN bias (resident)
            pl.BlockSpec((N_BINS, Dp), lambda n, i: (0, 0)),          # embed table (resident)
        ],
        out_specs=pl.BlockSpec((1, TL * L, Dp), lambda n, i: (n, i, 0)),
        compiler_params=pltpu.CompilerParams(
            dimension_semantics=("parallel", "parallel"),
            vmem_limit_bytes=_PAIR_VMEM_LIMIT,
        ),
    )(pfea2d, rc_pfea2d, cord_ca, cord_t, norm_p_w, norm_p_b, embed_w)

    return mfea_out, pfea_out2d.reshape(N, L, L, Dp)


# ---------------------------------------------------------------------------
# Pure-JAX reference (mirrors the PyTorch forward) for a sanity check.
# ---------------------------------------------------------------------------
def rc_embed_reference(mfea, pfea, params, rc_inputs):
    def ln(x, w, b):
        m = jnp.mean(x, axis=-1, keepdims=True)
        v = jnp.mean(jnp.square(x - m), axis=-1, keepdims=True)
        return (x - m) / jnp.sqrt(v + LN_EPS) * w + b

    cord = rc_inputs["cord"][:, :, 1, :].astype(jnp.float32)          # (N, L, 3)
    diff = cord[:, :, None, :] - cord[:, None, :, :]
    dist = jnp.sqrt(jnp.sum(diff * diff, axis=-1)).astype(mfea.dtype)
    idxs = jnp.clip(jnp.floor((dist - DIST_MIN) / BIN_WID).astype(jnp.int32), 0, N_BINS - 1)

    sfea_rc = ln(rc_inputs["sfea"], params["norm_m_w"], params["norm_m_b"])
    pfea_rc = ln(rc_inputs["pfea"], params["norm_p_w"], params["norm_p_b"]) + params["embed_w"][idxs]

    mfea_out = jnp.concatenate([(mfea[:, 0] + sfea_rc)[:, None], mfea[:, 1:]], axis=1)
    pfea_out = pfea + pfea_rc
    return mfea_out, pfea_out


if __name__ == "__main__":
    # Small shapes consistent with the module's forward; L=16 with a forced row tile of 8
    # so the multi-step tiled grid path is actually exercised.
    N, K, L, Dm, Dp, M = 2, 3, 16, 32, 32, N_ATOMS_PER_RESD

    key = jax.random.PRNGKey(0)
    ks = jax.random.split(key, 9)

    mfea = jax.random.normal(ks[0], (N, K, L, Dm), dtype=jnp.float32)
    pfea = jax.random.normal(ks[1], (N, L, L, Dp), dtype=jnp.float32)
    rc_inputs = {
        "sfea": jax.random.normal(ks[2], (N, L, Dm), dtype=jnp.float32),
        "pfea": jax.random.normal(ks[3], (N, L, L, Dp), dtype=jnp.float32),
        "cord": 8.0 * jax.random.normal(ks[4], (N, L, M, 3), dtype=jnp.float32),
    }

    # Deterministic non-zero parameters (module zero-inits; see note at top).
    params = {
        "norm_m_w": 1.0 + 0.1 * jax.random.normal(ks[5], (Dm,), dtype=jnp.float32),
        "norm_m_b": 0.1 * jax.random.normal(ks[6], (Dm,), dtype=jnp.float32),
        "norm_p_w": 1.0 + 0.1 * jax.random.normal(ks[7], (Dp,), dtype=jnp.float32),
        "norm_p_b": 0.05 * jnp.ones((Dp,), dtype=jnp.float32),
        "embed_w": 0.1 * jax.random.normal(ks[8], (N_BINS, Dp), dtype=jnp.float32),
    }

    fwd = jax.jit(rc_embed_forward, static_argnames=("row_tile",))
    mfea_out, pfea_out = fwd(mfea, pfea, params, rc_inputs, row_tile=8)
    jax.block_until_ready((mfea_out, pfea_out))

    mfea_ref, pfea_ref = rc_embed_reference(mfea, pfea, params, rc_inputs)
    assert jnp.allclose(mfea_out, mfea_ref, atol=1e-4, rtol=1e-4)
    assert jnp.allclose(pfea_out, pfea_ref, atol=1e-4, rtol=1e-4)

    print("KERNEL_OK")
</pallas_src>

<mosaic_0001>
module attributes {stable_mosaic.version = 11 : i64} {
  func.func @_msa_kernel(%arg0: i32, %arg1: memref<1x1x16x32xf32, #tpu.memory_space<vmem>>, %arg2: memref<1x16x32xf32, #tpu.memory_space<vmem>>, %arg3: memref<1x32xf32, #tpu.memory_space<vmem>>, %arg4: memref<1x32xf32, #tpu.memory_space<vmem>>, %arg5: memref<1x1x16x32xf32, #tpu.memory_space<vmem>>) attributes {dimension_semantics = [#tpu.dimension_semantics<parallel>], iteration_bounds = array<i64: 2>, scalar_prefetch = 0 : i64, scratch_operands = 0 : i64, tpu.core_type = #tpu.core_type<tc>, window_params = [{transform_indices = @transform_0, window_bounds = array<i64: 1, 1, 16, 32>}, {transform_indices = @transform_1, window_bounds = array<i64: 1, 16, 32>}, {pipeline_mode = #tpu.pipeline_mode<synchronous>, transform_indices = @transform_2, window_bounds = array<i64: 1, 32>}, {pipeline_mode = #tpu.pipeline_mode<synchronous>, transform_indices = @transform_3, window_bounds = array<i64: 1, 32>}, {transform_indices = @transform_4, window_bounds = array<i64: 1, 1, 16, 32>}]} {
    %c0 = arith.constant 0 : index
    %c0_0 = arith.constant 0 : index
    %c0_1 = arith.constant 0 : index
    %0 = vector.load %arg2[%c0, %c0_0, %c0_1] : memref<1x16x32xf32, #tpu.memory_space<vmem>>, vector<1x16x32xf32>
    %1 = vector.shape_cast %0 : vector<1x16x32xf32> to vector<16x32xf32>
    %c0_2 = arith.constant 0 : index
    %c0_3 = arith.constant 0 : index
    %2 = vector.load %arg3[%c0_2, %c0_3] : memref<1x32xf32, #tpu.memory_space<vmem>>, vector<1x32xf32>
    %3 = vector.shape_cast %2 : vector<1x32xf32> to vector<32xf32>
    %c0_4 = arith.constant 0 : index
    %c0_5 = arith.constant 0 : index
    %4 = vector.load %arg4[%c0_4, %c0_5] : memref<1x32xf32, #tpu.memory_space<vmem>>, vector<1x32xf32>
    %5 = vector.shape_cast %4 : vector<1x32xf32> to vector<32xf32>
    %cst = arith.constant dense<0.000000e+00> : vector<16xf32>
    %6 = vector.multi_reduction <add>, %1, %cst [1] : vector<16x32xf32> to vector<16xf32>
    %7 = vector.shape_cast %6 : vector<16xf32> to vector<16x1xf32>
    %cst_6 = arith.constant 3.200000e+01 : f32
    %8 = vector.broadcast %cst_6 : f32 to vector<16x1xf32>
    %9 = arith.divf %7, %8 : vector<16x1xf32>
    %10 = vector.broadcast %9 : vector<16x1xf32> to vector<16x32xf32>
    %11 = arith.subf %1, %10 : vector<16x32xf32>
    %12 = arith.mulf %11, %11 : vector<16x32xf32>
    %cst_7 = arith.constant dense<0.000000e+00> : vector<16xf32>
    %13 = vector.multi_reduction <add>, %12, %cst_7 [1] : vector<16x32xf32> to vector<16xf32>
    %14 = vector.shape_cast %13 : vector<16xf32> to vector<16x1xf32>
    %cst_8 = arith.constant 3.200000e+01 : f32
    %15 = vector.broadcast %cst_8 : f32 to vector<16x1xf32>
    %16 = arith.divf %14, %15 : vector<16x1xf32>
    %17 = vector.broadcast %9 : vector<16x1xf32> to vector<16x32xf32>
    %18 = arith.subf %1, %17 : vector<16x32xf32>
    %cst_9 = arith.constant 9.99999974E-6 : f32
    %19 = vector.broadcast %cst_9 : f32 to vector<16x1xf32>
    %20 = arith.addf %16, %19 : vector<16x1xf32>
    %21 = math.rsqrt %20 : vector<16x1xf32>
    %22 = vector.broadcast %21 : vector<16x1xf32> to vector<16x32xf32>
    %23 = arith.mulf %18, %22 : vector<16x32xf32>
    %24 = vector.shape_cast %3 : vector<32xf32> to vector<1x32xf32>
    %25 = vector.broadcast %24 : vector<1x32xf32> to vector<16x32xf32>
    %26 = arith.mulf %23, %25 : vector<16x32xf32>
    %27 = vector.shape_cast %5 : vector<32xf32> to vector<1x32xf32>
    %28 = vector.broadcast %27 : vector<1x32xf32> to vector<16x32xf32>
    %29 = arith.addf %26, %28 : vector<16x32xf32>
    %c0_10 = arith.constant 0 : index
    %c0_11 = arith.constant 0 : index
    %c0_12 = arith.constant 0 : index
    %c0_13 = arith.constant 0 : index
    %30 = vector.load %arg1[%c0_10, %c0_11, %c0_12, %c0_13] : memref<1x1x16x32xf32, #tpu.memory_space<vmem>>, vector<1x1x16x32xf32>
    %31 = vector.shape_cast %30 : vector<1x1x16x32xf32> to vector<16x32xf32>
    %32 = arith.addf %31, %29 : vector<16x32xf32>
    %c0_14 = arith.constant 0 : index
    %c0_15 = arith.constant 0 : index
    %c0_16 = arith.constant 0 : index
    %c0_17 = arith.constant 0 : index
    %33 = vector.load %arg5[%c0_14, %c0_15, %c0_16, %c0_17] : memref<1x1x16x32xf32, #tpu.memory_space<vmem>>, vector<1x1x16x32xf32>
    %34 = vector.shape_cast %33 : vector<1x1x16x32xf32> to vector<16x32xf32>
    %35 = vector.shape_cast %32 : vector<16x32xf32> to vector<1x1x16x32xf32>
    tpu.vector_store %arg5[%c0_14, %c0_15, %c0_16, %c0_17], %35 {strides = array<i32>} : memref<1x1x16x32xf32, #tpu.memory_space<vmem>>, vector<1x1x16x32xf32>,
    return
  }
  func.func @transform_0(%arg0: i32) -> (i32, i32, i32, i32) {
    %c0_i32 = arith.constant 0 : i32
    %c0_i32_0 = arith.constant 0 : i32
    %c0_i32_1 = arith.constant 0 : i32
    %c0_i32_2 = arith.constant 0 : i32
    return %arg0, %c0_i32, %c0_i32_0, %c0_i32_1 : i32, i32, i32, i32
  }
  func.func @transform_1(%arg0: i32) -> (i32, i32, i32) {
    %c0_i32 = arith.constant 0 : i32
    %c0_i32_0 = arith.constant 0 : i32
    %c0_i32_1 = arith.constant 0 : i32
    return %arg0, %c0_i32, %c0_i32_0 : i32, i32, i32
  }
  func.func @transform_2(%arg0: i32) -> (i32, i32) {
    %c0_i32 = arith.constant 0 : i32
    %c0_i32_0 = arith.constant 0 : i32
    %c0_i32_1 = arith.constant 0 : i32
    return %c0_i32, %c0_i32_0 : i32, i32
  }
  func.func @transform_3(%arg0: i32) -> (i32, i32) {
    %c0_i32 = arith.constant 0 : i32
    %c0_i32_0 = arith.constant 0 : i32
    %c0_i32_1 = arith.constant 0 : i32
    return %c0_i32, %c0_i32_0 : i32, i32
  }
  func.func @transform_4(%arg0: i32) -> (i32, i32, i32, i32) {
    %c0_i32 = arith.constant 0 : i32
    %c0_i32_0 = arith.constant 0 : i32
    %c0_i32_1 = arith.constant 0 : i32
    %c0_i32_2 = arith.constant 0 : i32
    return %arg0, %c0_i32, %c0_i32_0, %c0_i32_1 : i32, i32, i32, i32
  }
}

module attributes {stable_mosaic.version = 11 : i64} {
  func.func @_pair_kernel(%arg0: i32, %arg1: i32, %arg2: memref<1x128x32xf32, #tpu.memory_space<vmem>>, %arg3: memref<1x128x32xf32, #tpu.memory_space<vmem>>, %arg4: memref<1x8x3xf32, #tpu.memory_space<vmem>>, %arg5: memref<1x3x16xf32, #tpu.memory_space<vmem>>, %arg6: memref<1x32xf32, #tpu.memory_space<vmem>>, %arg7: memref<1x32xf32, #tpu.memory_space<vmem>>, %arg8: memref<18x32xf32, #tpu.memory_space<vmem>>, %arg9: memref<1x128x32xf32, #tpu.memory_space<vmem>>) attributes {dimension_semantics = [#tpu.dimension_semantics<parallel>, #tpu.dimension_semantics<parallel>], iteration_bounds = array<i64: 2, 2>, scalar_prefetch = 0 : i64, scratch_operands = 0 : i64, tpu.core_type = #tpu.core_type<tc>, window_params = [{transform_indices = @transform_0, window_bounds = array<i64: 1, 128, 32>}, {transform_indices = @transform_1, window_bounds = array<i64: 1, 128, 32>}, {transform_indices = @transform_2, window_bounds = array<i64: 1, 8, 3>}, {transform_indices = @transform_3, window_bounds = array<i64: 1, 3, 16>}, {pipeline_mode = #tpu.pipeline_mode<synchronous>, transform_indices = @transform_4, window_bounds = array<i64: 1, 32>}, {pipeline_mode = #tpu.pipeline_mode<synchronous>, transform_indices = @transform_5, window_bounds = array<i64: 1, 32>}, {pipeline_mode = #tpu.pipeline_mode<synchronous>, transform_indices = @transform_6, window_bounds = array<i64: 18, 32>}, {transform_indices = @transform_7, window_bounds = array<i64: 1, 128, 32>}]} {
    %c0 = arith.constant 0 : index
    %c0_0 = arith.constant 0 : index
    %c0_1 = arith.constant 0 : index
    %0 = vector.load %arg4[%c0, %c0_0, %c0_1] : memref<1x8x3xf32, #tpu.memory_space<vmem>>, vector<1x8x3xf32>
    %1 = vector.shape_cast %0 : vector<1x8x3xf32> to vector<8x3xf32>
    %c0_2 = arith.constant 0 : index
    %c0_3 = arith.constant 0 : index
    %c0_4 = arith.constant 0 : index
    %2 = vector.load %arg5[%c0_2, %c0_3, %c0_4] : memref<1x3x16xf32, #tpu.memory_space<vmem>>, vector<1x3x16xf32>
    %3 = vector.shape_cast %2 : vector<1x3x16xf32> to vector<3x16xf32>
    %cst = arith.constant 0.000000e+00 : f32
    %4 = vector.broadcast %cst : f32 to vector<8x16xf32>
    %5 = vector.extract_strided_slice %1 {offsets = [0, 0], sizes = [8, 1], strides = [1, 1]} : vector<8x3xf32> to vector<8x1xf32>
    %6 = vector.extract_strided_slice %3 {offsets = [0, 0], sizes = [1, 16], strides = [1, 1]} : vector<3x16xf32> to vector<1x16xf32>
    %7 = vector.broadcast %5 : vector<8x1xf32> to vector<8x16xf32>
    %8 = vector.broadcast %6 : vector<1x16xf32> to vector<8x16xf32>
    %9 = arith.subf %7, %8 : vector<8x16xf32>
    %10 = arith.mulf %9, %9 : vector<8x16xf32>
    %11 = arith.addf %4, %10 : vector<8x16xf32>
    %12 = vector.extract_strided_slice %1 {offsets = [0, 1], sizes = [8, 1], strides = [1, 1]} : vector<8x3xf32> to vector<8x1xf32>
    %13 = vector.extract_strided_slice %3 {offsets = [1, 0], sizes = [1, 16], strides = [1, 1]} : vector<3x16xf32> to vector<1x16xf32>
    %14 = vector.broadcast %12 : vector<8x1xf32> to vector<8x16xf32>
    %15 = vector.broadcast %13 : vector<1x16xf32> to vector<8x16xf32>
    %16 = arith.subf %14, %15 : vector<8x16xf32>
    %17 = arith.mulf %16, %16 : vector<8x16xf32>
    %18 = arith.addf %11, %17 : vector<8x16xf32>
    %19 = vector.extract_strided_slice %1 {offsets = [0, 2], sizes = [8, 1], strides = [1, 1]} : vector<8x3xf32> to vector<8x1xf32>
    %20 = vector.extract_strided_slice %3 {offsets = [2, 0], sizes = [1, 16], strides = [1, 1]} : vector<3x16xf32> to vector<1x16xf32>
    %21 = vector.broadcast %19 : vector<8x1xf32> to vector<8x16xf32>
    %22 = vector.broadcast %20 : vector<1x16xf32> to vector<8x16xf32>
    %23 = arith.subf %21, %22 : vector<8x16xf32>
    %24 = arith.mulf %23, %23 : vector<8x16xf32>
    %25 = arith.addf %18, %24 : vector<8x16xf32>
    %26 = math.sqrt %25 : vector<8x16xf32>
    %cst_5 = arith.constant 3.375000e+00 : f32
    %27 = vector.broadcast %cst_5 : f32 to vector<8x16xf32>
    %28 = arith.subf %26, %27 : vector<8x16xf32>
    %cst_6 = arith.constant 1.000000e+00 : f32
    %29 = vector.broadcast %cst_6 : f32 to vector<8x16xf32>
    %30 = arith.divf %28, %29 : vector<8x16xf32>
    %31 = math.floor %30 : vector<8x16xf32>
    %c0_i32 = arith.constant 0 : i32
    %c17_i32 = arith.constant 17 : i32
    %32 = arith.sitofp %c0_i32 : i32 to f32
    %33 = vector.broadcast %32 : f32 to vector<8x16xf32>
    %34 = arith.maximumf %33, %31 : vector<8x16xf32>
    %35 = arith.sitofp %c17_i32 : i32 to f32
    %36 = vector.broadcast %35 : f32 to vector<8x16xf32>
    %37 = arith.minimumf %36, %34 : vector<8x16xf32>
    %38 = arith.fptosi %37 : vector<8x16xf32> to vector<8x16xi32>
    %39 = tpu.iota {dimensions = array<i32: 2>} : vector<8x16x18xi32>
    %40 = vector.shape_cast %38 : vector<8x16xi32> to vector<8x16x1xi32>
    %41 = vector.broadcast %40 : vector<8x16x1xi32> to vector<8x16x18xi32>
    %42 = arith.cmpi eq, %41, %39 : vector<8x16x18xi32>
    %43 = arith.extui %42 : vector<8x16x18xi1> to vector<8x16x18xi32>
    %44 = arith.sitofp %43 : vector<8x16x18xi32> to vector<8x16x18xf32>
    %45 = vector.shape_cast %44 : vector<8x16x18xf32> to vector<128x18xf32>
    %c0_7 = arith.constant 0 : index
    %c0_8 = arith.constant 0 : index
    %46 = vector.load %arg8[%c0_7, %c0_8] : memref<18x32xf32, #tpu.memory_space<vmem>>, vector<18x32xf32>
    %cst_9 = arith.constant dense<0.000000e+00> : vector<128x32xf32>
    %47 = tpu.matmul %45, %46, %cst_9 {dimension_numbers = #tpu.dot_dimension_numbers<[1], [0], [0], [1], [0, 0, 1, 1], [], []>} : vector<128x18xf32>, vector<18x32xf32>, vector<128x32xf32> -> vector<128x32xf32>
    %c0_10 = arith.constant 0 : index
    %c0_11 = arith.constant 0 : index
    %c0_12 = arith.constant 0 : index
    %48 = vector.load %arg3[%c0_10, %c0_11, %c0_12] : memref<1x128x32xf32, #tpu.memory_space<vmem>>, vector<1x128x32xf32>
    %49 = vector.shape_cast %48 : vector<1x128x32xf32> to vector<128x32xf32>
    %c0_13 = arith.constant 0 : index
    %c0_14 = arith.constant 0 : index
    %50 = vector.load %arg6[%c0_13, %c0_14] : memref<1x32xf32, #tpu.memory_space<vmem>>, vector<1x32xf32>
    %51 = vector.shape_cast %50 : vector<1x32xf32> to vector<32xf32>
    %c0_15 = arith.constant 0 : index
    %c0_16 = arith.constant 0 : index
    %52 = vector.load %arg7[%c0_15, %c0_16] : memref<1x32xf32, #tpu.memory_space<vmem>>, vector<1x32xf32>
    %53 = vector.shape_cast %52 : vector<1x32xf32> to vector<32xf32>
    %cst_17 = arith.constant dense<0.000000e+00> : vector<128xf32>
    %54 = vector.multi_reduction <add>, %49, %cst_17 [1] : vector<128x32xf32> to vector<128xf32>
    %55 = vector.shape_cast %54 : vector<128xf32> to vector<128x1xf32>
    %cst_18 = arith.constant 3.200000e+01 : f32
    %56 = vector.broadcast %cst_18 : f32 to vector<128x1xf32>
    %57 = arith.divf %55, %56 : vector<128x1xf32>
    %58 = vector.broadcast %57 : vector<128x1xf32> to vector<128x32xf32>
    %59 = arith.subf %49, %58 : vector<128x32xf32>
    %60 = arith.mulf %59, %59 : vector<128x32xf32>
    %cst_19 = arith.constant dense<0.000000e+00> : vector<128xf32>
    %61 = vector.multi_reduction <add>, %60, %cst_19 [1] : vector<128x32xf32> to vector<128xf32>
    %62 = vector.shape_cast %61 : vector<128xf32> to vector<128x1xf32>
    %cst_20 = arith.constant 3.200000e+01 : f32
    %63 = vector.broadcast %cst_20 : f32 to vector<128x1xf32>
    %64 = arith.divf %62, %63 : vector<128x1xf32>
    %65 = vector.broadcast %57 : vector<128x1xf32> to vector<128x32xf32>
    %66 = arith.subf %49, %65 : vector<128x32xf32>
    %cst_21 = arith.constant 9.99999974E-6 : f32
    %67 = vector.broadcast %cst_21 : f32 to vector<128x1xf32>
    %68 = arith.addf %64, %67 : vector<128x1xf32>
    %69 = math.rsqrt %68 : vector<128x1xf32>
    %70 = vector.broadcast %69 : vector<128x1xf32> to vector<128x32xf32>
    %71 = arith.mulf %66, %70 : vector<128x32xf32>
    %72 = vector.shape_cast %51 : vector<32xf32> to vector<1x32xf32>
    %73 = vector.broadcast %72 : vector<1x32xf32> to vector<128x32xf32>
    %74 = arith.mulf %71, %73 : vector<128x32xf32>
    %75 = vector.shape_cast %53 : vector<32xf32> to vector<1x32xf32>
    %76 = vector.broadcast %75 : vector<1x32xf32> to vector<128x32xf32>
    %77 = arith.addf %74, %76 : vector<128x32xf32>
    %c0_22 = arith.constant 0 : index
    %c0_23 = arith.constant 0 : index
    %c0_24 = arith.constant 0 : index
    %78 = vector.load %arg2[%c0_22, %c0_23, %c0_24] : memref<1x128x32xf32, #tpu.memory_space<vmem>>, vector<1x128x32xf32>
    %79 = vector.shape_cast %78 : vector<1x128x32xf32> to vector<128x32xf32>
    %80 = arith.addf %79, %77 : vector<128x32xf32>
    %81 = arith.addf %80, %47 : vector<128x32xf32>
    %c0_25 = arith.constant 0 : index
    %c0_26 = arith.constant 0 : index
    %c0_27 = arith.constant 0 : index
    %82 = vector.load %arg9[%c0_25, %c0_26, %c0_27] : memref<1x128x32xf32, #tpu.memory_space<vmem>>, vector<1x128x32xf32>
    %83 = vector.shape_cast %82 : vector<1x128x32xf32> to vector<128x32xf32>
    %84 = vector.shape_cast %81 : vector<128x32xf32> to vector<1x128x32xf32>
    tpu.vector_store %arg9[%c0_25, %c0_26, %c0_27], %84 {strides = array<i32>} : memref<1x128x32xf32, #tpu.memory_space<vmem>>, vector<1x128x32xf32>,
    return
  }
  func.func @transform_0(%arg0: i32, %arg1: i32) -> (i32, i32, i32) {
    %c0_i32 = arith.constant 0 : i32
    %c0_i32_0 = arith.constant 0 : i32
    return %arg0, %arg1, %c0_i32 : i32, i32, i32
  }
  func.func @transform_1(%arg0: i32, %arg1: i32) -> (i32, i32, i32) {
    %c0_i32 = arith.constant 0 : i32
    %c0_i32_0 = arith.constant 0 : i32
    return %arg0, %arg1, %c0_i32 : i32, i32, i32
  }
  func.func @transform_2(%arg0: i32, %arg1: i32) -> (i32, i32, i32) {
    %c0_i32 = arith.constant 0 : i32
    %c0_i32_0 = arith.constant 0 : i32
    return %arg0, %arg1, %c0_i32 : i32, i32, i32
  }
  func.func @transform_3(%arg0: i32, %arg1: i32) -> (i32, i32, i32) {
    %c0_i32 = arith.constant 0 : i32
    %c0_i32_0 = arith.constant 0 : i32
    %c0_i32_1 = arith.constant 0 : i32
    return %arg0, %c0_i32, %c0_i32_0 : i32, i32, i32
  }
  func.func @transform_4(%arg0: i32, %arg1: i32) -> (i32, i32) {
    %c0_i32 = arith.constant 0 : i32
    %c0_i32_0 = arith.constant 0 : i32
    %c0_i32_1 = arith.constant 0 : i32
    return %c0_i32, %c0_i32_0 : i32, i32
  }
  func.func @transform_5(%arg0: i32, %arg1: i32) -> (i32, i32) {
    %c0_i32 = arith.constant 0 : i32
    %c0_i32_0 = arith.constant 0 : i32
    %c0_i32_1 = arith.constant 0 : i32
    return %c0_i32, %c0_i32_0 : i32, i32
  }
  func.func @transform_6(%arg0: i32, %arg1: i32) -> (i32, i32) {
    %c0_i32 = arith.constant 0 : i32
    %c0_i32_0 = arith.constant 0 : i32
    %c0_i32_1 = arith.constant 0 : i32
    return %c0_i32, %c0_i32_0 : i32, i32
  }
  func.func @transform_7(%arg0: i32, %arg1: i32) -> (i32, i32, i32) {
    %c0_i32 = arith.constant 0 : i32
    %c0_i32_0 = arith.constant 0 : i32
    return %arg0, %arg1, %c0_i32 : i32, i32, i32
  }
}

</mosaic_0001>

<llo_original>
// kernel: rc_embed_forward.2
$region0: #{rc_embed_forward.2}
  #allocation0 [shape = 'u32[]', space=smem, size = 0x4, offset = 0x4, fixed_abs, tag = 'smem constant byte address 0x4 - core index']
  #allocation1 [shape = 'u32[144,128]{1,0:T(1,128)}', space=vmem, size = 0x12000, scoped, tag = 'internal scratch']
  %s0 = inlined_call_operand.vmem [shape: f32[2,3,16,32], index: 0, kind: input, shape index: {}, may-alias: {0,4}]
  %s1 = inlined_call_operand.vmem [shape: f32[2,16,32], index: 1, kind: input, shape index: {}]
  %s2 = inlined_call_operand.vmem [shape: f32[1,32], index: 2, kind: input, shape index: {}]
  %s3 = inlined_call_operand.vmem [shape: f32[1,32], index: 3, kind: input, shape index: {}]
  %s4 = inlined_call_operand.vmem [shape: f32[2,3,16,32], index: 4, kind: output, shape index: {}, may-alias: {0,4}]
  %s5 = sld [smem:[#allocation0]]
  $region49: #{rc_embed_forward.2} parent=0
    _
  %s7 = ssub.s32 1, %s5
  %s8 = scalar_select 0, %s7, %s5
  loop: start=0, step=1, limit=4
  $region2: #{rc_embed_forward.2} parent=0 // loop_pre_header
    _
  $region3: #{rc_embed_forward.2} parent=0 // loop_header
    %s10 = sphi 0, %s14
    %p11 = scmp.ge.s32.totalorder %s10, 4
    %s20 = sphi 0, %s22
    %s23 = sphi 0, %s20
    %s24 = sphi 0, %s23
    %s40 = sphi 0, %s24
    %s46 = sphi 0, %s48
    %s49 = sphi 0, %s46
    %s50 = sphi 0, %s49
    %s66 = sphi 0, %s50
    %s70 = sphi 0, %s70
    %s72 = sphi 0, %s70
    %s73 = sphi 0, %s72
    %s87 = sphi 0, %s73
    %s91 = sphi 0, %s91
    %s93 = sphi 0, %s91
    %s94 = sphi 0, %s93
    %s108 = sphi 0, %s94
    %s114 = sphi 0, %s116
    %s117 = sphi 0, %s114
    %s118 = sphi 0, %s117
    %s134 = sphi 0, %s118
  $region4: #{rc_embed_forward.2} parent=0 // loop_header_branch
    %13 = sbr.rel (%p11) target = $region8
  $region5: #{rc_embed_forward.2} parent=0 // loop_body
    %s15 = ssub.s32 %s10, 1
    %s16 = ssub.s32 %s10, 2
    %s17 = sadd.s32 %s10, 1
    %s18 = ssub.s32 %s10, %s17
    %p19 = scmp.eq.s32.totalorder %s18, 0
    %s21 = sadd.s32 %s20, 1
    %s22 = scalar_select %p19, %s20, %s21
    %p25 = pneg %p19
    %p26 = scmp.eq.s32.totalorder %s10, 1
    %p27 = por %p25, %p26
    %p28 = scmp.ne.s32.totalorder %s20, %s23
    %p29 = scmp.eq.s32.totalorder %s10, 0
    %p30 = por %p28, %p29
    %p31 = scmp.ne.s32.totalorder %s20, %s23
    %p32 = scmp.eq.s32.totalorder %s15, 1
    %p33 = por %p31, %p32
    %p34 = scmp.ne.s32.totalorder %s23, %s24
    %p35 = scmp.eq.s32.totalorder %s15, 0
    %p36 = por %p34, %p35
    %p37 = scmp.ne.s32.totalorder %s23, %s24
    %p38 = scmp.eq.s32.totalorder %s16, 1
    %p39 = por %p37, %p38
    %p41 = scmp.ne.s32.totalorder %s24, %s40
    %p42 = scmp.eq.s32.totalorder %s16, 0
    %p43 = por %p41, %p42
    %s44 = ssub.s32 %s10, %s17
    %p45 = scmp.eq.s32.totalorder %s44, 0
    %s47 = sadd.s32 %s46, 1
    %s48 = scalar_select %p45, %s46, %s47
    %p51 = pneg %p45
    %p52 = scmp.eq.s32.totalorder %s10, 1
    %p53 = por %p51, %p52
    %p54 = scmp.ne.s32.totalorder %s46, %s49
    %p55 = scmp.eq.s32.totalorder %s10, 0
    %p56 = por %p54, %p55
    %p57 = scmp.ne.s32.totalorder %s46, %s49
    %p58 = scmp.eq.s32.totalorder %s15, 1
    %p59 = por %p57, %p58
    %p60 = scmp.ne.s32.totalorder %s49, %s50
    %p61 = scmp.eq.s32.totalorder %s15, 0
    %p62 = por %p60, %p61
    %p63 = scmp.ne.s32.totalorder %s49, %s50
    %p64 = scmp.eq.s32.totalorder %s16, 1
    %p65 = por %p63, %p64
    %p67 = scmp.ne.s32.totalorder %s50, %s66
    %p68 = scmp.eq.s32.totalorder %s16, 0
    %p69 = por %p67, %p68
    %s71 = sadd.s32 %s70, 1
    %p74 = scmp.eq.s32.totalorder %s10, 1
    %p75 = scmp.ne.s32.totalorder %s70, %s72
    %p76 = scmp.eq.s32.totalorder %s10, 0
    %p77 = por %p75, %p76
    %p78 = scmp.ne.s32.totalorder %s70, %s72
    %p79 = scmp.eq.s32.totalorder %s15, 1
    %p80 = por %p78, %p79
    %p81 = scmp.ne.s32.totalorder %s72, %s73
    %p82 = scmp.eq.s32.totalorder %s15, 0
    %p83 = por %p81, %p82
    %p84 = scmp.ne.s32.totalorder %s72, %s73
    %p85 = scmp.eq.s32.totalorder %s16, 1
    %p86 = por %p84, %p85
    %p88 = scmp.ne.s32.totalorder %s73, %s87
    %p89 = scmp.eq.s32.totalorder %s16, 0
    %p90 = por %p88, %p89
    %s92 = sadd.s32 %s91, 1
    %p95 = scmp.eq.s32.totalorder %s10, 1
    %p96 = scmp.ne.s32.totalorder %s91, %s93
    %p97 = scmp.eq.s32.totalorder %s10, 0
    %p98 = por %p96, %p97
    %p99 = scmp.ne.s32.totalorder %s91, %s93
    %p100 = scmp.eq.s32.totalorder %s15, 1
    %p101 = por %p99, %p100
    %p102 = scmp.ne.s32.totalorder %s93, %s94
    %p103 = scmp.eq.s32.totalorder %s15, 0
    %p104 = por %p102, %p103
    %p105 = scmp.ne.s32.totalorder %s93, %s94
    %p106 = scmp.eq.s32.totalorder %s16, 1
    %p107 = por %p105, %p106
    %p109 = scmp.ne.s32.totalorder %s94, %s108
    %p110 = scmp.eq.s32.totalorder %s16, 0
    %p111 = por %p109, %p110
    %s112 = ssub.s32 %s10, %s17
    %p113 = scmp.eq.s32.totalorder %s112, 0
    %s115 = sadd.s32 %s114, 1
    %s116 = scalar_select %p113, %s114, %s115
    %p119 = pneg %p113
    %p120 = scmp.eq.s32.totalorder %s10, 1
    %p121 = por %p119, %p120
    %p122 = scmp.ne.s32.totalorder %s114, %s117
    %p123 = scmp.eq.s32.totalorder %s10, 0
    %p124 = por %p122, %p123
    %p125 = scmp.ne.s32.totalorder %s114, %s117
    %p126 = scmp.eq.s32.totalorder %s15, 1
    %p127 = por %p125, %p126
    %p128 = scmp.ne.s32.totalorder %s117, %s118
    %p129 = scmp.eq.s32.totalorder %s15, 0
    %p130 = por %p128, %p129
    %p131 = scmp.ne.s32.totalorder %s117, %s118
    %p132 = scmp.eq.s32.totalorder %s16, 1
    %p133 = por %p131, %p132
    %p135 = scmp.ne.s32.totalorder %s118, %s134
    %p136 = scmp.eq.s32.totalorder %s16, 0
    %p137 = por %p135, %p136
    %p138 = scmp.le.s32.totalorder 1, %s10
    %p139 = scmp.lt.s32.totalorder %s10, 3
    %p140 = pnand %p138, %p139
    %p141 = pneg %p140
    // Predicated region
    $region9: #{rc_embed_forward.2} parent=5 // pred_check
      _
    $region10: #{rc_embed_forward.2} parent=5 // pred_check_branch
      %143 = sbr.rel (%p140) target = $region12
    $region11: #{rc_embed_forward.2} parent=5 // pred_region
      %s144 = ssub.s32 %s10, 1
      // Predicated region
      $region13: #{rc_embed_forward.2} parent=11 // pred_check
        %p145 = pneg %p83
      $region14: #{rc_embed_forward.2} parent=11 // pred_check_branch
        %147 = sbr.rel (%p145) target = $region16
      $region15: #{rc_embed_forward.2} parent=11 // pred_region
        _
      $region16: #{rc_embed_forward.2} parent=11 // pred_fallthru
        _
      // Predicated region
      $region17: #{rc_embed_forward.2} parent=11 // pred_check
        %p148 = pneg %p104
      $region18: #{rc_embed_forward.2} parent=11 // pred_check_branch
        %150 = sbr.rel (%p148) target = $region20
      $region19: #{rc_embed_forward.2} parent=11 // pred_region
        _
      $region20: #{rc_embed_forward.2} parent=11 // pred_fallthru
        _
    $region12: #{rc_embed_forward.2} parent=5 // pred_fallthru
      _
    %p151 = scmp.lt.s32.totalorder %s10, 2
    // Predicated region
    $region21: #{rc_embed_forward.2} parent=5 // pred_check
      %p152 = pneg %p151
    $region22: #{rc_embed_forward.2} parent=5 // pred_check_branch
      %154 = sbr.rel (%p152) target = $region24
    $region23: #{rc_embed_forward.2} parent=5 // pred_region
      // Predicated region
      $region25: #{rc_embed_forward.2} parent=23 // pred_check
        %p155 = pneg %p30
      $region26: #{rc_embed_forward.2} parent=23 // pred_check_branch
        %157 = sbr.rel (%p155) target = $region28
      $region27: #{rc_embed_forward.2} parent=23 // pred_region
        %p158 = scmp.lt.s32.totalorder %s10, 1
        %s159 = scalar_select %p158, %s10, 1
        %s160 = smul.addr %s159, 6
        %s161 = smul.addr %s160, 8
        %s162 = scalar_lea.vmem %s0, %s161
      $region28: #{rc_embed_forward.2} parent=23 // pred_fallthru
        _
      // Predicated region
      $region29: #{rc_embed_forward.2} parent=23 // pred_check
        %p163 = pneg %p56
      $region30: #{rc_embed_forward.2} parent=23 // pred_check_branch
        %165 = sbr.rel (%p163) target = $region32
      $region31: #{rc_embed_forward.2} parent=23 // pred_region
        %p166 = scmp.lt.s32.totalorder %s10, 1
        %s167 = scalar_select %p166, %s10, 1
        %s168 = smul.addr %s167, 2
        %s169 = smul.addr %s168, 8
        %s170 = scalar_lea.vmem %s1, %s169
      $region32: #{rc_embed_forward.2} parent=23 // pred_fallthru
        _
    $region24: #{rc_embed_forward.2} parent=5 // pred_fallthru
      _
    %p171 = scmp.le.s32.totalorder 1, %s10
    %p172 = scmp.lt.s32.totalorder %s10, 3
    %p173 = pnand %p171, %p172
    %p174 = pneg %p173
    // Predicated region
    $region33: #{rc_embed_forward.2} parent=5 // pred_check
      _
    $region34: #{rc_embed_forward.2} parent=5 // pred_check_branch
      %176 = sbr.rel (%p173) target = $region36
    $region35: #{rc_embed_forward.2} parent=5 // pred_region
      %s177 = ssub.s32 %s10, 1
      %p178 = scmp.lt.s32.totalorder %s15, 1
      %s179 = scalar_select %p178, %s15, 1
      %s180 = smul.addr %s179, 6
      %s181 = smul.addr %s180, 8
      %s182 = scalar_lea.vmem %s0, %s181
      %p183 = pneg %p36
      %p184 = pneg %p33
      %p185 = scmp.lt.s32.totalorder %s15, 1
      %s186 = scalar_select %p185, %s15, 1
      %s187 = smul.addr %s186, 2
      %s188 = smul.addr %s187, 8
      %s189 = scalar_lea.vmem %s1, %s188
      %p190 = pneg %p62
      %p191 = pneg %p59
      %p192 = pneg %p83
      %p193 = pneg %p80
      %p194 = pneg %p104
      %p195 = pneg %p101
      %p196 = pneg %p130
      %p197 = pneg %p127
      %p198 = scmp.lt.s32.totalorder %s15, 1
      %s199 = scalar_select %p198, %s15, 1
      %s200 = smul.addr %s199, 6
      %s201 = smul.addr %s200, 8
      %s202 = scalar_lea.vmem %s4, %s201
      %p203 = scmp.lt.s32.totalorder %s15, 1
      %s204 = scalar_select %p203, %s15, 1
      %s205 = smul.addr %s204, 6
      %s206 = smul.addr %s205, 8
      %s207 = scalar_lea.vmem %s0, %s206
      %p208 = scmp.lt.s32.totalorder %s15, 1
      %s209 = scalar_select %p208, %s15, 1
      %s210 = smul.addr %s209, 2
      %s211 = smul.addr %s210, 8
      %s212 = scalar_lea.vmem %s1, %s211
      %p213 = scmp.lt.s32.totalorder %s15, 1
      %s214 = scalar_select %p213, %s15, 1
      %s215 = smul.addr %s214, 6
      %s216 = smul.addr %s215, 8
      %s217 = scalar_lea.vmem %s4, %s216
      %v218 = vld [vmem:[%s212] sm:$0xff]
      %v219 = vld [vmem:[%s212 + $0x8] sm:$0xff]
      %v220 = vld [vmem:[%s2] sm:$0x1]
      %v221 = vld [vmem:[%s3] sm:$0x1]
      %vm222 = vcmask 261120
      %v223 = vsel %vm222, %v218, 0.0
      %224 = vadd.xlane.f32.xlu0 %v223
      %v225 = vpop.xlane.xlu0 %224
      %v226 = vsel %vm222, %v219, 0.0
      %227 = vadd.xlane.f32.xlu0 %v226
      %v228 = vpop.xlane.xlu0 %227
      %v229 = vrcp.pop 32.0
      %v230 = vmul.f32 %v225, %v229
      %v231 = vmul.f32 %v228, %v229
      %v232 = vsub.f32 %v218, %v230
      %v233 = vsub.f32 %v219, %v231
      %v234 = vmul.f32 %v232, %v232
      %v235 = vmul.f32 %v233, %v233
      %v236 = vsel %vm222, %v234, 0.0
      %237 = vadd.xlane.f32.xlu0 %v236
      %v238 = vpop.xlane.xlu0 %237
      %v239 = vsel %vm222, %v235, 0.0
      %240 = vadd.xlane.f32.xlu0 %v239
      %v241 = vpop.xlane.xlu0 %240
      %v242 = vmul.f32 %v238, %v229
      %v243 = vmul.f32 %v241, %v229
      %v244 = vadd.f32 %v242, 1e-05
      %v245 = vadd.f32 %v243, 1e-05
      %v246 = vrsqrt.pop %v244
      %v247 = vrsqrt.pop %v245
      %v248 = vmul.f32 %v232, %v246
      %v249 = vmul.f32 %v233, %v247
      %v251 = vlaneseq
      %v252 = vshrl.u32 %v251, 7
      %v253 = vsub.s32 0, %v252
      %v254 = vrot.slane %v220, %v253
      %v256 = vmul.f32 %v248, %v254
      %v257 = vmul.f32 %v249, %v254
      %v259 = vlaneseq
      %v260 = vshrl.u32 %v259, 7
      %v261 = vsub.s32 0, %v260
      %v262 = vrot.slane %v221, %v261
      %v264 = vadd.f32 %v256, %v262
      %v265 = vadd.f32 %v257, %v262
      %v266 = vld [vmem:[%s207] sm:$0xff]
      %v267 = vld [vmem:[%s207 + $0x8] sm:$0xff]
      %v268 = vadd.f32 %v266, %v264
      %v269 = vadd.f32 %v267, %v265
      %270 = vst.msk [vmem:[%s217] sm:$0xff] %vm222, %v268
      %271 = vst.msk [vmem:[%s217 + $0x8] sm:$0xff] %vm222, %v269
      %p272 = scmp.lt.s32.totalorder %s15, 1
      %s273 = scalar_select %p272, %s15, 1
      %s274 = smul.addr %s273, 6
      %s275 = smul.addr %s274, 8
      %s276 = scalar_lea.vmem %s4, %s275
      // Predicated region
      $region37: #{rc_embed_forward.2} parent=35 // pred_check
        %p277 = pneg %p127
      $region38: #{rc_embed_forward.2} parent=35 // pred_check_branch
        %279 = sbr.rel (%p277) target = $region40
      $region39: #{rc_embed_forward.2} parent=35 // pred_region
        _
      $region40: #{rc_embed_forward.2} parent=35 // pred_fallthru
        _
    $region36: #{rc_embed_forward.2} parent=5 // pred_fallthru
      _
    %p280 = scmp.le.s32.totalorder 2, %s10
    // Predicated region
    $region41: #{rc_embed_forward.2} parent=5 // pred_check
      %p281 = pneg %p280
    $region42: #{rc_embed_forward.2} parent=5 // pred_check_branch
      %283 = sbr.rel (%p281) target = $region44
    $region43: #{rc_embed_forward.2} parent=5 // pred_region
      %s284 = ssub.s32 %s10, 2
      // Predicated region
      $region45: #{rc_embed_forward.2} parent=43 // pred_check
        %p285 = pneg %p133
      $region46: #{rc_embed_forward.2} parent=43 // pred_check_branch
        %287 = sbr.rel (%p285) target = $region48
      $region47: #{rc_embed_forward.2} parent=43 // pred_region
        %p288 = scmp.lt.s32.totalorder %s16, 1
        %s289 = scalar_select %p288, %s16, 1
        %s290 = smul.addr %s289, 6
        %s291 = smul.addr %s290, 8
        %s292 = scalar_lea.vmem %s4, %s291
      $region48: #{rc_embed_forward.2} parent=43 // pred_fallthru
        _
    $region44: #{rc_embed_forward.2} parent=5 // pred_fallthru
      _
  $region6: #{rc_embed_forward.2} parent=0 // loop_footer
    %s14 = sadd.s32 1, %s10
  $region7: #{rc_embed_forward.2} parent=0 // loop_footer_branch
    %9 = sbr.rel target = $region3
  $region8: #{rc_embed_forward.2} parent=0 // loop_exit
    _

// kernel: rc_embed_forward.3
$region0: #{rc_embed_forward.3}
  #allocation0 [shape = 'u32[]', space=smem, size = 0x4, offset = 0x4, fixed_abs, tag = 'smem constant byte address 0x4 - core index']
  #allocation1 [shape = 'u32[144,128]{1,0:T(1,128)}', space=vmem, size = 0x12000, scoped, tag = 'internal scratch']
  %s0 = inlined_call_operand.hbm [shape: f32[2,256,32], index: 0, kind: input, shape index: {}]
  %s1 = inlined_call_operand.hbm [shape: f32[2,256,32], index: 1, kind: input, shape index: {}]
  %s2 = inlined_call_operand.vmem [shape: f32[2,16,3], index: 2, kind: input, shape index: {}]
  %s3 = inlined_call_operand.vmem [shape: f32[2,3,16], index: 3, kind: input, shape index: {}]
  %s4 = inlined_call_operand.vmem [shape: f32[1,32], index: 4, kind: input, shape index: {}]
  %s5 = inlined_call_operand.vmem [shape: f32[1,32], index: 5, kind: input, shape index: {}]
  %s6 = inlined_call_operand.vmem [shape: f32[18,32], index: 6, kind: input, shape index: {}]
  %s7 = inlined_call_operand.hbm [shape: f32[2,256,32], index: 7, kind: output, shape index: {}]
  %s8 = sld [smem:[#allocation0]]
  $region69: #{rc_embed_forward.3} parent=0
    _
  %s10 = ssub.s32 1, %s8
  %s11 = scalar_select 0, %s10, %s8
  $region1: #{rc_embed_forward.3} parent=0
    #allocation2 [shape = 'u8[131072]{0}', space=vmem, size = 0x20000, scoped, tag = 'input window, operand 0']
    #allocation3 [shape = 's32[2]{0}', space=sflag, size = 0x8, scoped, tag = 'scoped memory for rc_embed_forward.3']
    #allocation4 [shape = 's32[2]{0}', space=sflag, size = 0x8, scoped, tag = 'scoped memory for rc_embed_forward.3']
    #allocation5 [shape = 'u8[131072]{0}', space=vmem, size = 0x20000, scoped, tag = 'input window, operand 1']
    #allocation6 [shape = 's32[2]{0}', space=sflag, size = 0x8, scoped, tag = 'scoped memory for rc_embed_forward.3']
    #allocation7 [shape = 'u8[131072]{0}', space=vmem, size = 0x20000, scoped, tag = 'output window, operand 0']
    %12 = vsyncpa [#allocation3], 0
    %s13 = scalar_lea.sflag [#allocation3], 1
    %14 = vsyncpa %s13, 0
    %15 = vsyncpa [#allocation6], 0
    %s16 = scalar_lea.sflag [#allocation6], 1
    %17 = vsyncpa %s16, 0
    %18 = vsyncpa [#allocation4], 0
    %s19 = scalar_lea.sflag [#allocation4], 1
    %20 = vsyncpa %s19, 0
    loop: start=0, step=1, limit=6
    $region2: #{rc_embed_forward.3} parent=1 // loop_pre_header
      _
    $region3: #{rc_embed_forward.3} parent=1 // loop_header
      %s22 = sphi 0, %s26
      %p23 = scmp.ge.s32.totalorder %s22, 6
      %s29 = sphi 0, %s41
      %s30 = sphi 0, %s37
      %s31 = sphi 0, %s29
      %s32 = sphi 0, %s30
      %s33 = sphi 0, %s31
      %s34 = sphi 0, %s32
      %s46 = sphi 0, %s48
      %s49 = sphi 0, %s46
      %s50 = sphi 0, %s49
      %s66 = sphi 0, %s50
      %s74 = sphi 0, %s76
      %s77 = sphi 0, %s74
      %s78 = sphi 0, %s77
      %s94 = sphi 0, %s78
      %s102 = sphi 0, %s104
      %s105 = sphi 0, %s102
      %s106 = sphi 0, %s105
      %s122 = sphi 0, %s106
      %s128 = sphi 0, %s130
      %s131 = sphi 0, %s128
      %s132 = sphi 0, %s131
      %s148 = sphi 0, %s132
      %s152 = sphi 0, %s152
      %s154 = sphi 0, %s152
      %s155 = sphi 0, %s154
      %s169 = sphi 0, %s155
      %s173 = sphi 0, %s173
      %s175 = sphi 0, %s173
      %s176 = sphi 0, %s175
      %s190 = sphi 0, %s176
      %s194 = sphi 0, %s194
      %s196 = sphi 0, %s194
      %s197 = sphi 0, %s196
      %s211 = sphi 0, %s197
      %s219 = sphi 0, %s221
      %s222 = sphi 0, %s219
      %s223 = sphi 0, %s222
      %s239 = sphi 0, %s223
    $region4: #{rc_embed_forward.3} parent=1 // loop_header_branch
      %25 = sbr.rel (%p23) target = $region8
    $region5: #{rc_embed_forward.3} parent=1 // loop_body
      %s27 = ssub.s32 %s22, 1
      %s28 = ssub.s32 %s22, 2
      %s35 = sadd.s32 1, %s30
      %p36 = scmp.ge.s32.totalorder %s35, 2
      %s37 = scalar_select %p36, 0, %s35
      %s38 = sadd.s32 1, %s29
      %s39 = scalar_select %p36, %s38, %s29
      %p40 = scmp.ge.s32.totalorder %s39, 2
      %s41 = scalar_select %p40, 0, %s39
      %s42 = ssub.s32 %s29, %s41
      %s43 = ssub.s32 %s30, %s37
      %s44 = sor.u32 %s42, %s43
      %p45 = scmp.eq.s32.totalorder %s44, 0
      %s47 = sadd.s32 %s46, 1
      %s48 = scalar_select %p45, %s46, %s47
      %p51 = pneg %p45
      %p52 = scmp.eq.s32.totalorder %s22, 3
      %p53 = por %p51, %p52
      %p54 = scmp.ne.s32.totalorder %s46, %s49
      %p55 = scmp.eq.s32.totalorder %s22, 0
      %p56 = por %p54, %p55
      %p57 = scmp.ne.s32.totalorder %s46, %s49
      %p58 = scmp.eq.s32.totalorder %s27, 3
      %p59 = por %p57, %p58
      %p60 = scmp.ne.s32.totalorder %s49, %s50
      %p61 = scmp.eq.s32.totalorder %s27, 0
      %p62 = por %p60, %p61
      %p63 = scmp.ne.s32.totalorder %s49, %s50
      %p64 = scmp.eq.s32.totalorder %s28, 3
      %p65 = por %p63, %p64
      %p67 = scmp.ne.s32.totalorder %s50, %s66
      %p68 = scmp.eq.s32.totalorder %s28, 0
      %p69 = por %p67, %p68
      %s70 = ssub.s32 %s29, %s41
      %s71 = ssub.s32 %s30, %s37
      %s72 = sor.u32 %s70, %s71
      %p73 = scmp.eq.s32.totalorder %s72, 0
      %s75 = sadd.s32 %s74, 1
      %s76 = scalar_select %p73, %s74, %s75
      %p79 = pneg %p73
      %p80 = scmp.eq.s32.totalorder %s22, 3
      %p81 = por %p79, %p80
      %p82 = scmp.ne.s32.totalorder %s74, %s77
      %p83 = scmp.eq.s32.totalorder %s22, 0
      %p84 = por %p82, %p83
      %p85 = scmp.ne.s32.totalorder %s74, %s77
      %p86 = scmp.eq.s32.totalorder %s27, 3
      %p87 = por %p85, %p86
      %p88 = scmp.ne.s32.totalorder %s77, %s78
      %p89 = scmp.eq.s32.totalorder %s27, 0
      %p90 = por %p88, %p89
      %p91 = scmp.ne.s32.totalorder %s77, %s78
      %p92 = scmp.eq.s32.totalorder %s28, 3
      %p93 = por %p91, %p92
      %p95 = scmp.ne.s32.totalorder %s78, %s94
      %p96 = scmp.eq.s32.totalorder %s28, 0
      %p97 = por %p95, %p96
      %s98 = ssub.s32 %s29, %s41
      %s99 = ssub.s32 %s30, %s37
      %s100 = sor.u32 %s98, %s99
      %p101 = scmp.eq.s32.totalorder %s100, 0
      %s103 = sadd.s32 %s102, 1
      %s104 = scalar_select %p101, %s102, %s103
      %p107 = pneg %p101
      %p108 = scmp.eq.s32.totalorder %s22, 3
      %p109 = por %p107, %p108
      %p110 = scmp.ne.s32.totalorder %s102, %s105
      %p111 = scmp.eq.s32.totalorder %s22, 0
      %p112 = por %p110, %p111
      %p113 = scmp.ne.s32.totalorder %s102, %s105
      %p114 = scmp.eq.s32.totalorder %s27, 3
      %p115 = por %p113, %p114
      %p116 = scmp.ne.s32.totalorder %s105, %s106
      %p117 = scmp.eq.s32.totalorder %s27, 0
      %p118 = por %p116, %p117
      %p119 = scmp.ne.s32.totalorder %s105, %s106
      %p120 = scmp.eq.s32.totalorder %s28, 3
      %p121 = por %p119, %p120
      %p123 = scmp.ne.s32.totalorder %s106, %s122
      %p124 = scmp.eq.s32.totalorder %s28, 0
      %p125 = por %p123, %p124
      %s126 = ssub.s32 %s29, %s41
      %p127 = scmp.eq.s32.totalorder %s126, 0
      %s129 = sadd.s32 %s128, 1
      %s130 = scalar_select %p127, %s128, %s129
      %p133 = pneg %p127
      %p134 = scmp.eq.s32.totalorder %s22, 3
      %p135 = por %p133, %p134
      %p136 = scmp.ne.s32.totalorder %s128, %s131
      %p137 = scmp.eq.s32.totalorder %s22, 0
      %p138 = por %p136, %p137
      %p139 = scmp.ne.s32.totalorder %s128, %s131
      %p140 = scmp.eq.s32.totalorder %s27, 3
      %p141 = por %p139, %p140
      %p142 = scmp.ne.s32.totalorder %s131, %s132
      %p143 = scmp.eq.s32.totalorder %s27, 0
      %p144 = por %p142, %p143
      %p145 = scmp.ne.s32.totalorder %s131, %s132
      %p146 = scmp.eq.s32.totalorder %s28, 3
      %p147 = por %p145, %p146
      %p149 = scmp.ne.s32.totalorder %s132, %s148
      %p150 = scmp.eq.s32.totalorder %s28, 0
      %p151 = por %p149, %p150
      %s153 = sadd.s32 %s152, 1
      %p156 = scmp.eq.s32.totalorder %s22, 3
      %p157 = scmp.ne.s32.totalorder %s152, %s154
      %p158 = scmp.eq.s32.totalorder %s22, 0
      %p159 = por %p157, %p158
      %p160 = scmp.ne.s32.totalorder %s152, %s154
      %p161 = scmp.eq.s32.totalorder %s27, 3
      %p162 = por %p160, %p161
      %p163 = scmp.ne.s32.totalorder %s154, %s155
      %p164 = scmp.eq.s32.totalorder %s27, 0
      %p165 = por %p163, %p164
      %p166 = scmp.ne.s32.totalorder %s154, %s155
      %p167 = scmp.eq.s32.totalorder %s28, 3
      %p168 = por %p166, %p167
      %p170 = scmp.ne.s32.totalorder %s155, %s169
      %p171 = scmp.eq.s32.totalorder %s28, 0
      %p172 = por %p170, %p171
      %s174 = sadd.s32 %s173, 1
      %p177 = scmp.eq.s32.totalorder %s22, 3
      %p178 = scmp.ne.s32.totalorder %s173, %s175
      %p179 = scmp.eq.s32.totalorder %s22, 0
      %p180 = por %p178, %p179
      %p181 = scmp.ne.s32.totalorder %s173, %s175
      %p182 = scmp.eq.s32.totalorder %s27, 3
      %p183 = por %p181, %p182
      %p184 = scmp.ne.s32.totalorder %s175, %s176
      %p185 = scmp.eq.s32.totalorder %s27, 0
      %p186 = por %p184, %p185
      %p187 = scmp.ne.s32.totalorder %s175, %s176
      %p188 = scmp.eq.s32.totalorder %s28, 3
      %p189 = por %p187, %p188
      %p191 = scmp.ne.s32.totalorder %s176, %s190
      %p192 = scmp.eq.s32.totalorder %s28, 0
      %p193 = por %p191, %p192
      %s195 = sadd.s32 %s194, 1
      %p198 = scmp.eq.s32.totalorder %s22, 3
      %p199 = scmp.ne.s32.totalorder %s194, %s196
      %p200 = scmp.eq.s32.totalorder %s22, 0
      %p201 = por %p199, %p200
      %p202 = scmp.ne.s32.totalorder %s194, %s196
      %p203 = scmp.eq.s32.totalorder %s27, 3
      %p204 = por %p202, %p203
      %p205 = scmp.ne.s32.totalorder %s196, %s197
      %p206 = scmp.eq.s32.totalorder %s27, 0
      %p207 = por %p205, %p206
      %p208 = scmp.ne.s32.totalorder %s196, %s197
      %p209 = scmp.eq.s32.totalorder %s28, 3
      %p210 = por %p208, %p209
      %p212 = scmp.ne.s32.totalorder %s197, %s211
      %p213 = scmp.eq.s32.totalorder %s28, 0
      %p214 = por %p212, %p213
      %s215 = ssub.s32 %s29, %s41
      %s216 = ssub.s32 %s30, %s37
      %s217 = sor.u32 %s215, %s216
      %p218 = scmp.eq.s32.totalorder %s217, 0
      %s220 = sadd.s32 %s219, 1
      %s221 = scalar_select %p218, %s219, %s220
      %p224 = pneg %p218
      %p225 = scmp.eq.s32.totalorder %s22, 3
      %p226 = por %p224, %p225
      %p227 = scmp.ne.s32.totalorder %s219, %s222
      %p228 = scmp.eq.s32.totalorder %s22, 0
      %p229 = por %p227, %p228
      %p230 = scmp.ne.s32.totalorder %s219, %s222
      %p231 = scmp.eq.s32.totalorder %s27, 3
      %p232 = por %p230, %p231
      %p233 = scmp.ne.s32.totalorder %s222, %s223
      %p234 = scmp.eq.s32.totalorder %s27, 0
      %p235 = por %p233, %p234
      %p236 = scmp.ne.s32.totalorder %s222, %s223
      %p237 = scmp.eq.s32.totalorder %s28, 3
      %p238 = por %p236, %p237
      %p240 = scmp.ne.s32.totalorder %s223, %s239
      %p241 = scmp.eq.s32.totalorder %s28, 0
      %p242 = por %p240, %p241
      %p243 = scmp.le.s32.totalorder 1, %s22
      %p244 = scmp.lt.s32.totalorder %s22, 5
      %p245 = pnand %p243, %p244
      %p246 = pneg %p245
      // Predicated region
      $region9: #{rc_embed_forward.3} parent=5 // pred_check
        _
      $region10: #{rc_embed_forward.3} parent=5 // pred_check_branch
        %248 = sbr.rel (%p245) target = $region12
      $region11: #{rc_embed_forward.3} parent=5 // pred_region
        %s249 = ssub.s32 %s22, 1
        // Predicated region
        $region13: #{rc_embed_forward.3} parent=11 // pred_check
          %p250 = pneg %p165
        $region14: #{rc_embed_forward.3} parent=11 // pred_check_branch
          %252 = sbr.rel (%p250) target = $region16
        $region15: #{rc_embed_forward.3} parent=11 // pred_region
          _
        $region16: #{rc_embed_forward.3} parent=11 // pred_fallthru
          _
        // Predicated region
        $region17: #{rc_embed_forward.3} parent=11 // pred_check
          %p253 = pneg %p186
        $region18: #{rc_embed_forward.3} parent=11 // pred_check_branch
          %255 = sbr.rel (%p253) target = $region20
        $region19: #{rc_embed_forward.3} parent=11 // pred_region
          _
        $region20: #{rc_embed_forward.3} parent=11 // pred_fallthru
          _
        // Predicated region
        $region21: #{rc_embed_forward.3} parent=11 // pred_check
          %p256 = pneg %p207
        $region22: #{rc_embed_forward.3} parent=11 // pred_check_branch
          %258 = sbr.rel (%p256) target = $region24
        $region23: #{rc_embed_forward.3} parent=11 // pred_region
          _
        $region24: #{rc_embed_forward.3} parent=11 // pred_fallthru
          _
      $region12: #{rc_embed_forward.3} parent=5 // pred_fallthru
        _
      %p259 = scmp.lt.s32.totalorder %s22, 4
      // Predicated region
      $region25: #{rc_embed_forward.3} parent=5 // pred_check
        %p260 = pneg %p259
      $region26: #{rc_embed_forward.3} parent=5 // pred_check_branch
        %262 = sbr.rel (%p260) target = $region28
      $region27: #{rc_embed_forward.3} parent=5 // pred_region
        // Predicated region
        $region29: #{rc_embed_forward.3} parent=27 // pred_check
          %p263 = pneg %p56
        $region30: #{rc_embed_forward.3} parent=27 // pred_check_branch
          %265 = sbr.rel (%p263) target = $region32
        $region31: #{rc_embed_forward.3} parent=27 // pred_region
          %s266 = sand.u32 %s46, 1
          %s267 = scalar_lea.sflag [#allocation3], %s266
          %s268 = sand.u32 %s46, 1
          %s269 = smul.addr %s268, 128
          %s270 = scalar_lea.vmem [#allocation2], %s269
          %s271 = smul.u32 16, %s30
          %s273 = ssub.s32 2048, 2048
          %274 = vsyncadd %s267, %s273
          %s275 = smul.addr %s29, 32
          %s276 = sadd.s32 %s271, %s275
          %s277 = smul.addr %s276, 128
          %s278 = scalar_lea.hbm %s0, %s277
          %s279 = sshll.u32 %s270, 4
          %s280 = int_to_ptr.vmem [resolvable:$true] %s279
          %285 = dma.hbm_to_vmem [thread:$0]  %s278, 2048, %s280, %s267, 128, 128, 8
        $region32: #{rc_embed_forward.3} parent=27 // pred_fallthru
          _
        // Predicated region
        $region33: #{rc_embed_forward.3} parent=27 // pred_check
          %p286 = pneg %p84
        $region34: #{rc_embed_forward.3} parent=27 // pred_check_branch
          %288 = sbr.rel (%p286) target = $region36
        $region35: #{rc_embed_forward.3} parent=27 // pred_region
          %s289 = sand.u32 %s74, 1
          %s290 = scalar_lea.sflag [#allocation6], %s289
          %s291 = sand.u32 %s74, 1
          %s292 = smul.addr %s291, 128
          %s293 = scalar_lea.vmem [#allocation5], %s292
          %s294 = smul.u32 16, %s30
          %s296 = ssub.s32 2048, 2048
          %297 = vsyncadd %s290, %s296
          %s298 = smul.addr %s29, 32
          %s299 = sadd.s32 %s294, %s298
          %s300 = smul.addr %s299, 128
          %s301 = scalar_lea.hbm %s1, %s300
          %s302 = sshll.u32 %s293, 4
          %s303 = int_to_ptr.vmem [resolvable:$true] %s302
          %308 = dma.hbm_to_vmem [thread:$0]  %s301, 2048, %s303, %s290, 128, 128, 8
        $region36: #{rc_embed_forward.3} parent=27 // pred_fallthru
          _
        // Predicated region
        $region37: #{rc_embed_forward.3} parent=27 // pred_check
          %p309 = pneg %p112
        $region38: #{rc_embed_forward.3} parent=27 // pred_check_branch
          %311 = sbr.rel (%p309) target = $region40
        $region39: #{rc_embed_forward.3} parent=27 // pred_region
          %p312 = scmp.lt.s32.totalorder %s29, 1
          %s313 = scalar_select %p312, %s29, 1
          %p314 = scmp.lt.s32.totalorder %s30, 1
          %s315 = scalar_select %p314, %s30, 1
          %s316 = smul.addr %s313, 2
          %s317 = sadd.s32 %s315, %s316
          %s318 = smul.addr %s317, 8
          %s319 = scalar_lea.vmem %s2, %s318
        $region40: #{rc_embed_forward.3} parent=27 // pred_fallthru
          _
        // Predicated region
        $region41: #{rc_embed_forward.3} parent=27 // pred_check
          %p320 = pneg %p138
        $region42: #{rc_embed_forward.3} parent=27 // pred_check_branch
          %322 = sbr.rel (%p320) target = $region44
        $region43: #{rc_embed_forward.3} parent=27 // pred_region
          %p323 = scmp.lt.s32.totalorder %s29, 1
          %s324 = scalar_select %p323, %s29, 1
          %s325 = smul.addr %s324, 4
          %s326 = scalar_lea.vmem %s3, %s325
        $region44: #{rc_embed_forward.3} parent=27 // pred_fallthru
          _
      $region28: #{rc_embed_forward.3} parent=5 // pred_fallthru
        _
      %p327 = scmp.le.s32.totalorder 1, %s22
      %p328 = scmp.lt.s32.totalorder %s22, 5
      %p329 = pnand %p327, %p328
      %p330 = pneg %p329
      // Predicated region
      $region45: #{rc_embed_forward.3} parent=5 // pred_check
        _
      $region46: #{rc_embed_forward.3} parent=5 // pred_check_branch
        %332 = sbr.rel (%p329) target = $region48
      $region47: #{rc_embed_forward.3} parent=5 // pred_region
        %s333 = ssub.s32 %s22, 1
        %s334 = sand.u32 %s49, 1
        %s335 = scalar_lea.sflag [#allocation3], %s334
        %s336 = sand.u32 %s49, 1
        %s337 = smul.addr %s336, 128
        %s338 = scalar_lea.vmem [#allocation2], %s337
        // Predicated region
        $region49: #{rc_embed_forward.3} parent=47 // pred_check
          %p339 = pneg %p62
        $region50: #{rc_embed_forward.3} parent=47 // pred_check_branch
          %341 = sbr.rel (%p339) target = $region52
        $region51: #{rc_embed_forward.3} parent=47 // pred_region
          %342 = dma.done %s335, 2048
        $region52: #{rc_embed_forward.3} parent=47 // pred_fallthru
          _
        %s343 = sand.u32 %s77, 1
        %s344 = scalar_lea.sflag [#allocation6], %s343
        %s345 = sand.u32 %s77, 1
        %s346 = smul.addr %s345, 128
        %s347 = scalar_lea.vmem [#allocation5], %s346
        // Predicated region
        $region53: #{rc_embed_forward.3} parent=47 // pred_check
          %p348 = pneg %p90
        $region54: #{rc_embed_forward.3} parent=47 // pred_check_branch
          %350 = sbr.rel (%p348) target = $region56
        $region55: #{rc_embed_forward.3} parent=47 // pred_region
          %351 = dma.done %s344, 2048
        $region56: #{rc_embed_forward.3} parent=47 // pred_fallthru
          _
        %s352 = sand.u32 %s49, 1
        %s353 = scalar_lea.sflag [#allocation3], %s352
        %s354 = sand.u32 %s49, 1
        %s355 = smul.addr %s354, 128
        %s356 = scalar_lea.vmem [#allocation2], %s355
        %p357 = pneg %p62
        %p358 = pneg %p59
        %s359 = sand.u32 %s77, 1
        %s360 = scalar_lea.sflag [#allocation6], %s359
        %s361 = sand.u32 %s77, 1
        %s362 = smul.addr %s361, 128
        %s363 = scalar_lea.vmem [#allocation5], %s362
        %p364 = pneg %p90
        %p365 = pneg %p87
        %p366 = scmp.lt.s32.totalorder %s31, 1
        %s367 = scalar_select %p366, %s31, 1
        %p368 = scmp.lt.s32.totalorder %s32, 1
        %s369 = scalar_select %p368, %s32, 1
        %s370 = smul.addr %s367, 2
        %s371 = sadd.s32 %s369, %s370
        %s372 = smul.addr %s371, 8
        %s373 = scalar_lea.vmem %s2, %s372
        %p374 = pneg %p118
        %p375 = pneg %p115
        %p376 = scmp.lt.s32.totalorder %s31, 1
        %s377 = scalar_select %p376, %s31, 1
        %s378 = smul.addr %s377, 4
        %s379 = scalar_lea.vmem %s3, %s378
        %p380 = pneg %p144
        %p381 = pneg %p141
        %p382 = pneg %p165
        %p383 = pneg %p162
        %p384 = pneg %p186
        %p385 = pneg %p183
        %p386 = pneg %p207
        %p387 = pneg %p204
        %p388 = pneg %p235
        %p389 = pneg %p232
        %s390 = sand.u32 %s222, 1
        %s391 = scalar_lea.sflag [#allocation4], %s390
        %s392 = sand.u32 %s222, 1
        %s393 = smul.addr %s392, 128
        %s394 = scalar_lea.vmem [#allocation7], %s393
        %s395 = smul.u32 16, %s32
        %s396 = smul.u32 16, %s32
        %p397 = scmp.lt.s32.totalorder %s31, 1
        %s398 = scalar_select %p397, %s31, 1
        %p399 = scmp.lt.s32.totalorder %s32, 1
        %s400 = scalar_select %p399, %s32, 1
        %s401 = smul.addr %s398, 2
        %s402 = sadd.s32 %s400, %s401
        %s403 = smul.addr %s402, 8
        %s404 = scalar_lea.vmem %s2, %s403
        %p405 = scmp.lt.s32.totalorder %s31, 1
        %s406 = scalar_select %p405, %s31, 1
        %s407 = smul.addr %s406, 4
        %s408 = scalar_lea.vmem %s3, %s407
        %s409 = smul.u32 16, %s32
        %v410 = vld [vmem:[%s404] sm:$0xff]
        %v411 = vld [vmem:[%s408] sm:$0x7]
        %413 = vset.pattern.permute.xlu0 0
        %414 = vperm.xlu0 %413, %v410
        %v415 = vpop.permute.xlu0 %414
        %v417 = vlaneseq
        %v418 = vshrl.u32 %v417, 7
        %v419 = vsub.s32 0, %v418
        %v420 = vrot.slane %v411, %v419
        %v421 = vsub.f32 %v415, %v420
        %v422 = vmul.f32 %v421, %v421
        %v423 = vadd.f32 %v422, 0.0
        %424 = vset.pattern.permute.xlu0 1
        %425 = vperm.xlu0 %424, %v410
        %v426 = vpop.permute.xlu0 %425
        %v428 = vlaneseq
        %v429 = vshrl.u32 %v428, 7
        %v430 = vsub.s32 1, %v429
        %v431 = vrot.slane %v411, %v430
        %v432 = vsub.f32 %v426, %v431
        %v433 = vmul.f32 %v432, %v432
        %v434 = vadd.f32 %v423, %v433
        %435 = vset.pattern.permute.xlu0 2
        %436 = vperm.xlu0 %435, %v410
        %v437 = vpop.permute.xlu0 %436
        %v439 = vlaneseq
        %v440 = vshrl.u32 %v439, 7
        %v441 = vsub.s32 2, %v440
        %v442 = vrot.slane %v411, %v441
        %v443 = vsub.f32 %v437, %v442
        %v444 = vmul.f32 %v443, %v443
        %v445 = vadd.f32 %v434, %v444
        %v446 = vrsqrt.pop %v445
        %v447 = vmul.f32 %v445, %v446
        %vm448 = vcmp.eq.f32.partialorder %v445, inf
        %v449 = vsel %vm448, %v445, %v447
        %vm450 = vcmp.eq.f32.partialorder %v445, 0.0
        %v451 = vand.u32 %v445, 2147483648
        %v452 = vsel %vm450, %v451, %v449
        %v453 = vsub.f32 %v452, 3.375
        %v454 = vfloor.f32 %v453
        %v455 = vmax.f32 %v454, 0.0
        %v456 = vmin.f32 %v455, 17.0
        %v457 = vcvt.f32.s32.to.zero.pseudo %v456
        %v458 = vlaneseq
        %v459 = vand.u32 %v458, 127
        %v460 = vlaneseq
        %v461 = vshrl.u32 %v460, 7
        %v462 = vsub.s32 0, %v461
        %v463 = vrot.slane %v457, %v462
        %465 = vbcast.lane.b32.xlu0 %v463, 256
        %v466 = vpop.permute.xlu0 %465
        %s468 = sor.u32 256, 8
        %469 = vbcast.lane.b32.xlu0 %v463, %s468
        %v470 = vpop.permute.xlu0 %469
        %v471 = vlaneseq
        %v472 = vshrl.u32 %v471, 7
        %v473 = vsub.s32 1, %v472
        %v474 = vrot.slane %v457, %v473
        %476 = vbcast.lane.b32.xlu0 %v474, 256
        %v477 = vpop.permute.xlu0 %476
        %s479 = sor.u32 256, 8
        %480 = vbcast.lane.b32.xlu0 %v474, %s479
        %v481 = vpop.permute.xlu0 %480
        %v482 = vlaneseq
        %v483 = vshrl.u32 %v482, 7
        %v484 = vsub.s32 2, %v483
        %v485 = vrot.slane %v457, %v484
        %487 = vbcast.lane.b32.xlu0 %v485, 256
        %v488 = vpop.permute.xlu0 %487
        %s490 = sor.u32 256, 8
        %491 = vbcast.lane.b32.xlu0 %v485, %s490
        %v492 = vpop.permute.xlu0 %491
        %v493 = vlaneseq
        %v494 = vshrl.u32 %v493, 7
        %v495 = vsub.s32 3, %v494
        %v496 = vrot.slane %v457, %v495
        %498 = vbcast.lane.b32.xlu0 %v496, 256
        %v499 = vpop.permute.xlu0 %498
        %s501 = sor.u32 256, 8
        %502 = vbcast.lane.b32.xlu0 %v496, %s501
        %v503 = vpop.permute.xlu0 %502
        %v504 = vlaneseq
        %v505 = vshrl.u32 %v504, 7
        %v506 = vsub.s32 4, %v505
        %v507 = vrot.slane %v457, %v506
        %509 = vbcast.lane.b32.xlu0 %v507, 256
        %v510 = vpop.permute.xlu0 %509
        %s512 = sor.u32 256, 8
        %513 = vbcast.lane.b32.xlu0 %v507, %s512
        %v514 = vpop.permute.xlu0 %513
        %v515 = vlaneseq
        %v516 = vshrl.u32 %v515, 7
        %v517 = vsub.s32 5, %v516
        %v518 = vrot.slane %v457, %v517
        %520 = vbcast.lane.b32.xlu0 %v518, 256
        %v521 = vpop.permute.xlu0 %520
        %s523 = sor.u32 256, 8
        %524 = vbcast.lane.b32.xlu0 %v518, %s523
        %v525 = vpop.permute.xlu0 %524
        %v526 = vlaneseq
        %v527 = vshrl.u32 %v526, 7
        %v528 = vsub.s32 6, %v527
        %v529 = vrot.slane %v457, %v528
        %531 = vbcast.lane.b32.xlu0 %v529, 256
        %v532 = vpop.permute.xlu0 %531
        %s534 = sor.u32 256, 8
        %535 = vbcast.lane.b32.xlu0 %v529, %s534
        %v536 = vpop.permute.xlu0 %535
        %v537 = vlaneseq
        %v538 = vshrl.u32 %v537, 7
        %v539 = vsub.s32 7, %v538
        %v540 = vrot.slane %v457, %v539
        %542 = vbcast.lane.b32.xlu0 %v540, 256
        %v543 = vpop.permute.xlu0 %542
        %s545 = sor.u32 256, 8
        %546 = vbcast.lane.b32.xlu0 %v540, %s545
        %v547 = vpop.permute.xlu0 %546
        %vm548 = vcmp.eq.s32.totalorder %v466, %v459
        %vm549 = vcmp.eq.s32.totalorder %v470, %v459
        %vm550 = vcmp.eq.s32.totalorder %v477, %v459
        %vm551 = vcmp.eq.s32.totalorder %v481, %v459
        %vm552 = vcmp.eq.s32.totalorder %v488, %v459
        %vm553 = vcmp.eq.s32.totalorder %v492, %v459
        %vm554 = vcmp.eq.s32.totalorder %v499, %v459
        %vm555 = vcmp.eq.s32.totalorder %v503, %v459
        %vm556 = vcmp.eq.s32.totalorder %v510, %v459
        %vm557 = vcmp.eq.s32.totalorder %v514, %v459
        %vm558 = vcmp.eq.s32.totalorder %v521, %v459
        %vm559 = vcmp.eq.s32.totalorder %v525, %v459
        %vm560 = vcmp.eq.s32.totalorder %v532, %v459
        %vm561 = vcmp.eq.s32.totalorder %v536, %v459
        %vm562 = vcmp.eq.s32.totalorder %v543, %v459
        %vm563 = vcmp.eq.s32.totalorder %v547, %v459
        %v564 = vsel %vm548, 1, 0
        %v565 = vsel %vm549, 1, 0
        %v566 = vsel %vm550, 1, 0
        %v567 = vsel %vm551, 1, 0
        %v568 = vsel %vm552, 1, 0
        %v569 = vsel %vm553, 1, 0
        %v570 = vsel %vm554, 1, 0
        %v571 = vsel %vm555, 1, 0
        %v572 = vsel %vm556, 1, 0
        %v573 = vsel %vm557, 1, 0
        %v574 = vsel %vm558, 1, 0
        %v575 = vsel %vm559, 1, 0
        %v576 = vsel %vm560, 1, 0
        %v577 = vsel %vm561, 1, 0
        %v578 = vsel %vm562, 1, 0
        %v579 = vsel %vm563, 1, 0
        %v580 = vcvt.s32.f32 %v564
        %v581 = vcvt.s32.f32 %v565
        %v582 = vcvt.s32.f32 %v566
        %v583 = vcvt.s32.f32 %v567
        %v584 = vcvt.s32.f32 %v568
        %v585 = vcvt.s32.f32 %v569
        %v586 = vcvt.s32.f32 %v570
        %v587 = vcvt.s32.f32 %v571
        %v588 = vcvt.s32.f32 %v572
        %v589 = vcvt.s32.f32 %v573
        %v590 = vcvt.s32.f32 %v574
        %v591 = vcvt.s32.f32 %v575
        %v592 = vcvt.s32.f32 %v576
        %v593 = vcvt.s32.f32 %v577
        %v594 = vcvt.s32.f32 %v578
        %v595 = vcvt.s32.f32 %v579
        %v596 = vld [vmem:[%s6] sm:$0xff]
        %v597 = vld [vmem:[%s6 + $0x8] sm:$0xff]
        %v598 = vld [vmem:[%s6 + $0x10] sm:$0x3]
        %vm599 = vcmask 146432
        %v601 = vsel %vm599, %v580, 0
        %v604 = vsel %vm599, %v581, 0
        %v607 = vsel %vm599, %v582, 0
        %v610 = vsel %vm599, %v583, 0
        %v613 = vsel %vm599, %v584, 0
        %v616 = vsel %vm599, %v585, 0
        %v619 = vsel %vm599, %v586, 0
        %v622 = vsel %vm599, %v587, 0
        %v625 = vsel %vm599, %v588, 0
        %v628 = vsel %vm599, %v589, 0
        %v631 = vsel %vm599, %v590, 0
        %v634 = vsel %vm599, %v591, 0
        %v637 = vsel %vm599, %v592, 0
        %v640 = vsel %vm599, %v593, 0
        %v643 = vsel %vm599, %v594, 0
        %v646 = vsel %vm599, %v595, 0
        %vm648 = vcmask 1041408
        %v650 = vsel %vm648, %v598, 0
        %652 = vmatprep.subr.mxu0 0.0
        %653 = vmatpush1.msra.mxu0 0.0
        %654 = vmatprep.subr.mxu0 0.0
        %655 = vmatpush1.msra.mxu0 0.0
        %656 = vmatprep.subr.mxu0 0.0
        %657 = vmatpush1.msra.mxu0 0.0
        %658 = vmatprep.subr.mxu0 0.0
        %659 = vmatpush1.msra.mxu0 0.0
        %660 = vmatprep.subr.mxu0 0.0
        %661 = vmatpush1.msra.mxu0 0.0
        %662 = vmatprep.subr.mxu0 0.0
        %663 = vmatpush1.msra.mxu0 0.0
        %664 = vmatprep.subr.mxu0 0.0
        %665 = vmatpush1.msra.mxu0 0.0
        %666 = vmatprep.subr.mxu0 0.0
        %667 = vmatpush1.msra.mxu0 0.0
        %668 = vmatprep.subr.mxu0 0.0
        %669 = vmatpush1.msra.mxu0 0.0
        %670 = vmatprep.subr.mxu0 0.0
        %671 = vmatpush1.msra.mxu0 0.0
        %672 = vmatprep.subr.mxu0 0.0
        %673 = vmatpush1.msra.mxu0 0.0
        %674 = vmatprep.subr.mxu0 0.0
        %675 = vmatpush1.msra.mxu0 0.0
        %676 = vmatprep.subr.mxu0 0.0
        %677 = vmatpush1.msra.mxu0 0.0
        %678 = vmatprep.subr.mxu0 0.0
        %679 = vmatpush1.msra.mxu0 %v650
        %680 = vmatprep.subr.mxu0 0.0
        %681 = vmatpush1.msra.mxu0 %v597
        %682 = vmatprep.subr.mxu0 0.0
        %683 = vmatpush1.msra.mxu0 %v596
        %684 = vmatprep.subr.mxu0 0.0
        %685 = vmatpush2.msra.mxu0 0.0
        %686 = vmatprep.subr.mxu0 0.0
        %687 = vmatpush2.msra.mxu0 0.0
        %688 = vmatprep.subr.mxu0 0.0
        %689 = vmatpush2.msra.mxu0 0.0
        %690 = vmatprep.subr.mxu0 0.0
        %691 = vmatpush2.msra.mxu0 0.0
        %692 = vmatprep.subr.mxu0 0.0
        %693 = vmatpush2.msra.mxu0 0.0
        %694 = vmatprep.subr.mxu0 0.0
        %695 = vmatpush2.msra.mxu0 0.0
        %696 = vmatprep.subr.mxu0 0.0
        %697 = vmatpush2.msra.mxu0 0.0
        %698 = vmatprep.subr.mxu0 0.0
        %699 = vmatpush2.msra.mxu0 0.0
        %700 = vmatprep.subr.mxu0 0.0
        %701 = vmatpush2.msra.mxu0 0.0
        %702 = vmatprep.subr.mxu0 0.0
        %703 = vmatpush2.msra.mxu0 0.0
        %704 = vmatprep.subr.mxu0 0.0
        %705 = vmatpush2.msra.mxu0 0.0
        %706 = vmatprep.subr.mxu0 0.0
        %707 = vmatpush2.msra.mxu0 0.0
        %708 = vmatprep.subr.mxu0 0.0
        %709 = vmatpush2.msra.mxu0 0.0
        %710 = vmatprep.subr.mxu0 0.0
        %711 = vmatpush2.msra.mxu0 0.0
        %712 = vmatprep.subr.mxu0 0.0
        %713 = vmatpush2.msra.mxu0 0.0
        %714 = vmatprep.subr.mxu0 0.0
        %715 = vmatpush2.msra.mxu0 0.0
        %716 = vmatprep.mubr.f32.mxu0 0.0
        %717 = vmatmul.mubr.f32.gmra.mxu0 %v601
        %v718 = vpop.f32.mrf.mxu0
        %v719 = vadd.f32 0.0, %v718
        %v720 = vpop.f32.mrf.mxu0
        %721 = vmatprep.mubr.f32.mxu0 0.0
        %722 = vmatmul.mubr.f32.gmra.mxu0 %v604
        %v723 = vpop.f32.mrf.mxu0
        %v724 = vadd.f32 0.0, %v723
        %v725 = vpop.f32.mrf.mxu0
        %726 = vmatprep.mubr.f32.mxu0 0.0
        %727 = vmatmul.mubr.f32.gmra.mxu0 %v607
        %v728 = vpop.f32.mrf.mxu0
        %v729 = vadd.f32 0.0, %v728
        %v730 = vpop.f32.mrf.mxu0
        %731 = vmatprep.mubr.f32.mxu0 0.0
        %732 = vmatmul.mubr.f32.gmra.mxu0 %v610
        %v733 = vpop.f32.mrf.mxu0
        %v734 = vadd.f32 0.0, %v733
        %v735 = vpop.f32.mrf.mxu0
        %736 = vmatprep.mubr.f32.mxu0 0.0
        %737 = vmatmul.mubr.f32.gmra.mxu0 %v613
        %v738 = vpop.f32.mrf.mxu0
        %v739 = vadd.f32 0.0, %v738
        %v740 = vpop.f32.mrf.mxu0
        %741 = vmatprep.mubr.f32.mxu0 0.0
        %742 = vmatmul.mubr.f32.gmra.mxu0 %v616
        %v743 = vpop.f32.mrf.mxu0
        %v744 = vadd.f32 0.0, %v743
        %v745 = vpop.f32.mrf.mxu0
        %746 = vmatprep.mubr.f32.mxu0 0.0
        %747 = vmatmul.mubr.f32.gmra.mxu0 %v619
        %v748 = vpop.f32.mrf.mxu0
        %v749 = vadd.f32 0.0, %v748
        %v750 = vpop.f32.mrf.mxu0
        %751 = vmatprep.mubr.f32.mxu0 0.0
        %752 = vmatmul.mubr.f32.gmra.mxu0 %v622
        %v753 = vpop.f32.mrf.mxu0
        %v754 = vadd.f32 0.0, %v753
        %v755 = vpop.f32.mrf.mxu0
        %756 = vmatprep.mubr.f32.mxu0 0.0
        %757 = vmatmul.mubr.f32.gmra.mxu0 %v625
        %v758 = vpop.f32.mrf.mxu0
        %v759 = vadd.f32 0.0, %v758
        %v760 = vpop.f32.mrf.mxu0
        %761 = vmatprep.mubr.f32.mxu0 0.0
        %762 = vmatmul.mubr.f32.gmra.mxu0 %v628
        %v763 = vpop.f32.mrf.mxu0
        %v764 = vadd.f32 0.0, %v763
        %v765 = vpop.f32.mrf.mxu0
        %766 = vmatprep.mubr.f32.mxu0 0.0
        %767 = vmatmul.mubr.f32.gmra.mxu0 %v631
        %v768 = vpop.f32.mrf.mxu0
        %v769 = vadd.f32 0.0, %v768
        %v770 = vpop.f32.mrf.mxu0
        %771 = vmatprep.mubr.f32.mxu0 0.0
        %772 = vmatmul.mubr.f32.gmra.mxu0 %v634
        %v773 = vpop.f32.mrf.mxu0
        %v774 = vadd.f32 0.0, %v773
        %v775 = vpop.f32.mrf.mxu0
        %776 = vmatprep.mubr.f32.mxu0 0.0
        %777 = vmatmul.mubr.f32.gmra.mxu0 %v637
        %v778 = vpop.f32.mrf.mxu0
        %v779 = vadd.f32 0.0, %v778
        %v780 = vpop.f32.mrf.mxu0
        %781 = vmatprep.mubr.f32.mxu0 0.0
        %782 = vmatmul.mubr.f32.gmra.mxu0 %v640
        %v783 = vpop.f32.mrf.mxu0
        %v784 = vadd.f32 0.0, %v783
        %v785 = vpop.f32.mrf.mxu0
        %786 = vmatprep.mubr.f32.mxu0 0.0
        %787 = vmatmul.mubr.f32.gmra.mxu0 %v643
        %v788 = vpop.f32.mrf.mxu0
        %v789 = vadd.f32 0.0, %v788
        %v790 = vpop.f32.mrf.mxu0
        %791 = vmatprep.mubr.f32.mxu0 0.0
        %792 = vmatmul.mubr.f32.gmra.mxu0 %v646
        %v793 = vpop.f32.mrf.mxu0
        %v794 = vadd.f32 0.0, %v793
        %v795 = vpop.f32.mrf.mxu0
        %796 = vdwg.mxu0
        %v797 = vld [vmem:[%s347] sm:$0xff]
        %v798 = vld [vmem:[%s347 + $0x8] sm:$0xff]
        %v799 = vld [vmem:[%s347 + $0x10] sm:$0xff]
        %v800 = vld [vmem:[%s347 + $0x18] sm:$0xff]
        %v801 = vld [vmem:[%s347 + $0x20] sm:$0xff]
        %v802 = vld [vmem:[%s347 + $0x28] sm:$0xff]
        %v803 = vld [vmem:[%s347 + $0x30] sm:$0xff]
        %v804 = vld [vmem:[%s347 + $0x38] sm:$0xff]
        %v805 = vld [vmem:[%s347 + $0x40] sm:$0xff]
        %v806 = vld [vmem:[%s347 + $0x48] sm:$0xff]
        %v807 = vld [vmem:[%s347 + $0x50] sm:$0xff]
        %v808 = vld [vmem:[%s347 + $0x58] sm:$0xff]
        %v809 = vld [vmem:[%s347 + $0x60] sm:$0xff]
        %v810 = vld [vmem:[%s347 + $0x68] sm:$0xff]
        %v811 = vld [vmem:[%s347 + $0x70] sm:$0xff]
        %v812 = vld [vmem:[%s347 + $0x78] sm:$0xff]
        %v813 = vld [vmem:[%s4] sm:$0x1]
        %v814 = vld [vmem:[%s5] sm:$0x1]
        %vm815 = vcmask 261120
        %v816 = vsel %vm815, %v797, 0.0
        %817 = vadd.xlane.f32.xlu0 %v816
        %v818 = vpop.xlane.xlu0 %817
        %v819 = vsel %vm815, %v798, 0.0
        %820 = vadd.xlane.f32.xlu0 %v819
        %v821 = vpop.xlane.xlu0 %820
        %v822 = vsel %vm815, %v799, 0.0
        %823 = vadd.xlane.f32.xlu0 %v822
        %v824 = vpop.xlane.xlu0 %823
        %v825 = vsel %vm815, %v800, 0.0
        %826 = vadd.xlane.f32.xlu0 %v825
        %v827 = vpop.xlane.xlu0 %826
        %v828 = vsel %vm815, %v801, 0.0
        %829 = vadd.xlane.f32.xlu0 %v828
        %v830 = vpop.xlane.xlu0 %829
        %v831 = vsel %vm815, %v802, 0.0
        %832 = vadd.xlane.f32.xlu0 %v831
        %v833 = vpop.xlane.xlu0 %832
        %v834 = vsel %vm815, %v803, 0.0
        %835 = vadd.xlane.f32.xlu0 %v834
        %v836 = vpop.xlane.xlu0 %835
        %v837 = vsel %vm815, %v804, 0.0
        %838 = vadd.xlane.f32.xlu0 %v837
        %v839 = vpop.xlane.xlu0 %838
        %v840 = vsel %vm815, %v805, 0.0
        %841 = vadd.xlane.f32.xlu0 %v840
        %v842 = vpop.xlane.xlu0 %841
        %v843 = vsel %vm815, %v806, 0.0
        %844 = vadd.xlane.f32.xlu0 %v843
        %v845 = vpop.xlane.xlu0 %844
        %v846 = vsel %vm815, %v807, 0.0
        %847 = vadd.xlane.f32.xlu0 %v846
        %v848 = vpop.xlane.xlu0 %847
        %v849 = vsel %vm815, %v808, 0.0
        %850 = vadd.xlane.f32.xlu0 %v849
        %v851 = vpop.xlane.xlu0 %850
        %v852 = vsel %vm815, %v809, 0.0
        %853 = vadd.xlane.f32.xlu0 %v852
        %v854 = vpop.xlane.xlu0 %853
        %v855 = vsel %vm815, %v810, 0.0
        %856 = vadd.xlane.f32.xlu0 %v855
        %v857 = vpop.xlane.xlu0 %856
        %v858 = vsel %vm815, %v811, 0.0
        %859 = vadd.xlane.f32.xlu0 %v858
        %v860 = vpop.xlane.xlu0 %859
        %v861 = vsel %vm815, %v812, 0.0
        %862 = vadd.xlane.f32.xlu0 %v861
        %v863 = vpop.xlane.xlu0 %862
        %v864 = vrcp.pop 32.0
        %v865 = vmul.f32 %v818, %v864
        %v866 = vmul.f32 %v821, %v864
        %v867 = vmul.f32 %v824, %v864
        %v868 = vmul.f32 %v827, %v864
        %v869 = vmul.f32 %v830, %v864
        %v870 = vmul.f32 %v833, %v864
        %v871 = vmul.f32 %v836, %v864
        %v872 = vmul.f32 %v839, %v864
        %v873 = vmul.f32 %v842, %v864
        %v874 = vmul.f32 %v845, %v864
        %v875 = vmul.f32 %v848, %v864
        %v876 = vmul.f32 %v851, %v864
        %v877 = vmul.f32 %v854, %v864
        %v878 = vmul.f32 %v857, %v864
        %v879 = vmul.f32 %v860, %v864
        %v880 = vmul.f32 %v863, %v864
        %v881 = vsub.f32 %v797, %v865
        %v882 = vsub.f32 %v798, %v866
        %v883 = vsub.f32 %v799, %v867
        %v884 = vsub.f32 %v800, %v868
        %v885 = vsub.f32 %v801, %v869
        %v886 = vsub.f32 %v802, %v870
        %v887 = vsub.f32 %v803, %v871
        %v888 = vsub.f32 %v804, %v872
        %v889 = vsub.f32 %v805, %v873
        %v890 = vsub.f32 %v806, %v874
        %v891 = vsub.f32 %v807, %v875
        %v892 = vsub.f32 %v808, %v876
        %v893 = vsub.f32 %v809, %v877
        %v894 = vsub.f32 %v810, %v878
        %v895 = vsub.f32 %v811, %v879
        %v896 = vsub.f32 %v812, %v880
        %v897 = vmul.f32 %v881, %v881
        %v898 = vmul.f32 %v882, %v882
        %v899 = vmul.f32 %v883, %v883
        %v900 = vmul.f32 %v884, %v884
        %v901 = vmul.f32 %v885, %v885
        %v902 = vmul.f32 %v886, %v886
        %v903 = vmul.f32 %v887, %v887
        %v904 = vmul.f32 %v888, %v888
        %v905 = vmul.f32 %v889, %v889
        %v906 = vmul.f32 %v890, %v890
        %v907 = vmul.f32 %v891, %v891
        %v908 = vmul.f32 %v892, %v892
        %v909 = vmul.f32 %v893, %v893
        %v910 = vmul.f32 %v894, %v894
        %v911 = vmul.f32 %v895, %v895
        %v912 = vmul.f32 %v896, %v896
        %v913 = vsel %vm815, %v897, 0.0
        %914 = vadd.xlane.f32.xlu0 %v913
        %v915 = vpop.xlane.xlu0 %914
        %v916 = vsel %vm815, %v898, 0.0
        %917 = vadd.xlane.f32.xlu0 %v916
        %v918 = vpop.xlane.xlu0 %917
        %v919 = vsel %vm815, %v899, 0.0
        %920 = vadd.xlane.f32.xlu0 %v919
        %v921 = vpop.xlane.xlu0 %920
        %v922 = vsel %vm815, %v900, 0.0
        %923 = vadd.xlane.f32.xlu0 %v922
        %v924 = vpop.xlane.xlu0 %923
        %v925 = vsel %vm815, %v901, 0.0
        %926 = vadd.xlane.f32.xlu0 %v925
        %v927 = vpop.xlane.xlu0 %926
        %v928 = vsel %vm815, %v902, 0.0
        %929 = vadd.xlane.f32.xlu0 %v928
        %v930 = vpop.xlane.xlu0 %929
        %v931 = vsel %vm815, %v903, 0.0
        %932 = vadd.xlane.f32.xlu0 %v931
        %v933 = vpop.xlane.xlu0 %932
        %v934 = vsel %vm815, %v904, 0.0
        %935 = vadd.xlane.f32.xlu0 %v934
        %v936 = vpop.xlane.xlu0 %935
        %v937 = vsel %vm815, %v905, 0.0
        %938 = vadd.xlane.f32.xlu0 %v937
        %v939 = vpop.xlane.xlu0 %938
        %v940 = vsel %vm815, %v906, 0.0
        %941 = vadd.xlane.f32.xlu0 %v940
        %v942 = vpop.xlane.xlu0 %941
        %v943 = vsel %vm815, %v907, 0.0
        %944 = vadd.xlane.f32.xlu0 %v943
        %v945 = vpop.xlane.xlu0 %944
        %v946 = vsel %vm815, %v908, 0.0
        %947 = vadd.xlane.f32.xlu0 %v946
        %v948 = vpop.xlane.xlu0 %947
        %v949 = vsel %vm815, %v909, 0.0
        %950 = vadd.xlane.f32.xlu0 %v949
        %v951 = vpop.xlane.xlu0 %950
        %v952 = vsel %vm815, %v910, 0.0
        %953 = vadd.xlane.f32.xlu0 %v952
        %v954 = vpop.xlane.xlu0 %953
        %v955 = vsel %vm815, %v911, 0.0
        %956 = vadd.xlane.f32.xlu0 %v955
        %v957 = vpop.xlane.xlu0 %956
        %v958 = vsel %vm815, %v912, 0.0
        %959 = vadd.xlane.f32.xlu0 %v958
        %v960 = vpop.xlane.xlu0 %959
        %v961 = vmul.f32 %v915, %v864
        %v962 = vmul.f32 %v918, %v864
        %v963 = vmul.f32 %v921, %v864
        %v964 = vmul.f32 %v924, %v864
        %v965 = vmul.f32 %v927, %v864
        %v966 = vmul.f32 %v930, %v864
        %v967 = vmul.f32 %v933, %v864
        %v968 = vmul.f32 %v936, %v864
        %v969 = vmul.f32 %v939, %v864
        %v970 = vmul.f32 %v942, %v864
        %v971 = vmul.f32 %v945, %v864
        %v972 = vmul.f32 %v948, %v864
        %v973 = vmul.f32 %v951, %v864
        %v974 = vmul.f32 %v954, %v864
        %v975 = vmul.f32 %v957, %v864
        %v976 = vmul.f32 %v960, %v864
        %v977 = vadd.f32 %v961, 1e-05
        %v978 = vadd.f32 %v962, 1e-05
        %v979 = vadd.f32 %v963, 1e-05
        %v980 = vadd.f32 %v964, 1e-05
        %v981 = vadd.f32 %v965, 1e-05
        %v982 = vadd.f32 %v966, 1e-05
        %v983 = vadd.f32 %v967, 1e-05
        %v984 = vadd.f32 %v968, 1e-05
        %v985 = vadd.f32 %v969, 1e-05
        %v986 = vadd.f32 %v970, 1e-05
        %v987 = vadd.f32 %v971, 1e-05
        %v988 = vadd.f32 %v972, 1e-05
        %v989 = vadd.f32 %v973, 1e-05
        %v990 = vadd.f32 %v974, 1e-05
        %v991 = vadd.f32 %v975, 1e-05
        %v992 = vadd.f32 %v976, 1e-05
        %v993 = vrsqrt.pop %v977
        %v994 = vrsqrt.pop %v978
        %v995 = vrsqrt.pop %v979
        %v996 = vrsqrt.pop %v980
        %v997 = vrsqrt.pop %v981
        %v998 = vrsqrt.pop %v982
        %v999 = vrsqrt.pop %v983
        %v1000 = vrsqrt.pop %v984
        %v1001 = vrsqrt.pop %v985
        %v1002 = vrsqrt.pop %v986
        %v1003 = vrsqrt.pop %v987
        %v1004 = vrsqrt.pop %v988
        %v1005 = vrsqrt.pop %v989
        %v1006 = vrsqrt.pop %v990
        %v1007 = vrsqrt.pop %v991
        %v1008 = vrsqrt.pop %v992
        %v1009 = vmul.f32 %v881, %v993
        %v1010 = vmul.f32 %v882, %v994
        %v1011 = vmul.f32 %v883, %v995
        %v1012 = vmul.f32 %v884, %v996
        %v1013 = vmul.f32 %v885, %v997
        %v1014 = vmul.f32 %v886, %v998
        %v1015 = vmul.f32 %v887, %v999
        %v1016 = vmul.f32 %v888, %v1000
        %v1017 = vmul.f32 %v889, %v1001
        %v1018 = vmul.f32 %v890, %v1002
        %v1019 = vmul.f32 %v891, %v1003
        %v1020 = vmul.f32 %v892, %v1004
        %v1021 = vmul.f32 %v893, %v1005
        %v1022 = vmul.f32 %v894, %v1006
        %v1023 = vmul.f32 %v895, %v1007
        %v1024 = vmul.f32 %v896, %v1008
        %v1026 = vlaneseq
        %v1027 = vshrl.u32 %v1026, 7
        %v1028 = vsub.s32 0, %v1027
        %v1029 = vrot.slane %v813, %v1028
        %v1031 = vmul.f32 %v1009, %v1029
        %v1032 = vmul.f32 %v1010, %v1029
        %v1033 = vmul.f32 %v1011, %v1029
        %v1034 = vmul.f32 %v1012, %v1029
        %v1035 = vmul.f32 %v1013, %v1029
        %v1036 = vmul.f32 %v1014, %v1029
        %v1037 = vmul.f32 %v1015, %v1029
        %v1038 = vmul.f32 %v1016, %v1029
        %v1039 = vmul.f32 %v1017, %v1029
        %v1040 = vmul.f32 %v1018, %v1029
        %v1041 = vmul.f32 %v1019, %v1029
        %v1042 = vmul.f32 %v1020, %v1029
        %v1043 = vmul.f32 %v1021, %v1029
        %v1044 = vmul.f32 %v1022, %v1029
        %v1045 = vmul.f32 %v1023, %v1029
        %v1046 = vmul.f32 %v1024, %v1029
        %v1048 = vlaneseq
        %v1049 = vshrl.u32 %v1048, 7
        %v1050 = vsub.s32 0, %v1049
        %v1051 = vrot.slane %v814, %v1050
        %v1053 = vadd.f32 %v1031, %v1051
        %v1054 = vadd.f32 %v1032, %v1051
        %v1055 = vadd.f32 %v1033, %v1051
        %v1056 = vadd.f32 %v1034, %v1051
        %v1057 = vadd.f32 %v1035, %v1051
        %v1058 = vadd.f32 %v1036, %v1051
        %v1059 = vadd.f32 %v1037, %v1051
        %v1060 = vadd.f32 %v1038, %v1051
        %v1061 = vadd.f32 %v1039, %v1051
        %v1062 = vadd.f32 %v1040, %v1051
        %v1063 = vadd.f32 %v1041, %v1051
        %v1064 = vadd.f32 %v1042, %v1051
        %v1065 = vadd.f32 %v1043, %v1051
        %v1066 = vadd.f32 %v1044, %v1051
        %v1067 = vadd.f32 %v1045, %v1051
        %v1068 = vadd.f32 %v1046, %v1051
        %v1069 = vld [vmem:[%s338] sm:$0xff]
        %v1070 = vld [vmem:[%s338 + $0x8] sm:$0xff]
        %v1071 = vld [vmem:[%s338 + $0x10] sm:$0xff]
        %v1072 = vld [vmem:[%s338 + $0x18] sm:$0xff]
        %v1073 = vld [vmem:[%s338 + $0x20] sm:$0xff]
        %v1074 = vld [vmem:[%s338 + $0x28] sm:$0xff]
        %v1075 = vld [vmem:[%s338 + $0x30] sm:$0xff]
        %v1076 = vld [vmem:[%s338 + $0x38] sm:$0xff]
        %v1077 = vld [vmem:[%s338 + $0x40] sm:$0xff]
        %v1078 = vld [vmem:[%s338 + $0x48] sm:$0xff]
        %v1079 = vld [vmem:[%s338 + $0x50] sm:$0xff]
        %v1080 = vld [vmem:[%s338 + $0x58] sm:$0xff]
        %v1081 = vld [vmem:[%s338 + $0x60] sm:$0xff]
        %v1082 = vld [vmem:[%s338 + $0x68] sm:$0xff]
        %v1083 = vld [vmem:[%s338 + $0x70] sm:$0xff]
        %v1084 = vld [vmem:[%s338 + $0x78] sm:$0xff]
        %v1085 = vadd.f32 %v1069, %v1053
        %v1086 = vadd.f32 %v1070, %v1054
        %v1087 = vadd.f32 %v1071, %v1055
        %v1088 = vadd.f32 %v1072, %v1056
        %v1089 = vadd.f32 %v1073, %v1057
        %v1090 = vadd.f32 %v1074, %v1058
        %v1091 = vadd.f32 %v1075, %v1059
        %v1092 = vadd.f32 %v1076, %v1060
        %v1093 = vadd.f32 %v1077, %v1061
        %v1094 = vadd.f32 %v1078, %v1062
        %v1095 = vadd.f32 %v1079, %v1063
        %v1096 = vadd.f32 %v1080, %v1064
        %v1097 = vadd.f32 %v1081, %v1065
        %v1098 = vadd.f32 %v1082, %v1066
        %v1099 = vadd.f32 %v1083, %v1067
        %v1100 = vadd.f32 %v1084, %v1068
        %v1101 = vadd.f32 %v1085, %v719
        %v1102 = vadd.f32 %v1086, %v724
        %v1103 = vadd.f32 %v1087, %v729
        %v1104 = vadd.f32 %v1088, %v734
        %v1105 = vadd.f32 %v1089, %v739
        %v1106 = vadd.f32 %v1090, %v744
        %v1107 = vadd.f32 %v1091, %v749
        %v1108 = vadd.f32 %v1092, %v754
        %v1109 = vadd.f32 %v1093, %v759
        %v1110 = vadd.f32 %v1094, %v764
        %v1111 = vadd.f32 %v1095, %v769
        %v1112 = vadd.f32 %v1096, %v774
        %v1113 = vadd.f32 %v1097, %v779
        %v1114 = vadd.f32 %v1098, %v784
        %v1115 = vadd.f32 %v1099, %v789
        %v1116 = vadd.f32 %v1100, %v794
        %1117 = vst.msk [vmem:[%s394] sm:$0xff] %vm815, %v1101
        %1118 = vst.msk [vmem:[%s394 + $0x8] sm:$0xff] %vm815, %v1102
        %1119 = vst.msk [vmem:[%s394 + $0x10] sm:$0xff] %vm815, %v1103
        %1120 = vst.msk [vmem:[%s394 + $0x18] sm:$0xff] %vm815, %v1104
        %1121 = vst.msk [vmem:[%s394 + $0x20] sm:$0xff] %vm815, %v1105
        %1122 = vst.msk [vmem:[%s394 + $0x28] sm:$0xff] %vm815, %v1106
        %1123 = vst.msk [vmem:[%s394 + $0x30] sm:$0xff] %vm815, %v1107
        %1124 = vst.msk [vmem:[%s394 + $0x38] sm:$0xff] %vm815, %v1108
        %1125 = vst.msk [vmem:[%s394 + $0x40] sm:$0xff] %vm815, %v1109
        %1126 = vst.msk [vmem:[%s394 + $0x48] sm:$0xff] %vm815, %v1110
        %1127 = vst.msk [vmem:[%s394 + $0x50] sm:$0xff] %vm815, %v1111
        %1128 = vst.msk [vmem:[%s394 + $0x58] sm:$0xff] %vm815, %v1112
        %1129 = vst.msk [vmem:[%s394 + $0x60] sm:$0xff] %vm815, %v1113
        %1130 = vst.msk [vmem:[%s394 + $0x68] sm:$0xff] %vm815, %v1114
        %1131 = vst.msk [vmem:[%s394 + $0x70] sm:$0xff] %vm815, %v1115
        %1132 = vst.msk [vmem:[%s394 + $0x78] sm:$0xff] %vm815, %v1116
        %s1133 = sand.u32 %s222, 1
        %s1134 = scalar_lea.sflag [#allocation4], %s1133
        %s1135 = sand.u32 %s222, 1
        %s1136 = smul.addr %s1135, 128
        %s1137 = scalar_lea.vmem [#allocation7], %s1136
        // Predicated region
        $region57: #{rc_embed_forward.3} parent=47 // pred_check
          %p1138 = pneg %p232
        $region58: #{rc_embed_forward.3} parent=47 // pred_check_branch
          %1140 = sbr.rel (%p1138) target = $region60
        $region59: #{rc_embed_forward.3} parent=47 // pred_region
          %s1141 = smul.u32 16, %s32
          %s1143 = ssub.s32 2048, 2048
          %1144 = vsyncadd %s1134, %s1143
          %s1145 = smul.addr %s31, 32
          %s1146 = sadd.s32 %s1141, %s1145
          %s1147 = smul.addr %s1146, 128
          %s1148 = scalar_lea.hbm %s7, %s1147
          %s1149 = sshll.u32 %s1137, 4
          %s1150 = int_to_ptr.vmem [resolvable:$true] %s1149
          %1155 = dma.vmem_to_hbm [thread:$0]  %s1150, 2048, %s1148, %s1134, 128, 128, 8
        $region60: #{rc_embed_forward.3} parent=47 // pred_fallthru
          _
      $region48: #{rc_embed_forward.3} parent=5 // pred_fallthru
        _
      %p1156 = scmp.le.s32.totalorder 2, %s22
      // Predicated region
      $region61: #{rc_embed_forward.3} parent=5 // pred_check
        %p1157 = pneg %p1156
      $region62: #{rc_embed_forward.3} parent=5 // pred_check_branch
        %1159 = sbr.rel (%p1157) target = $region64
      $region63: #{rc_embed_forward.3} parent=5 // pred_region
        %s1160 = ssub.s32 %s22, 2
        // Predicated region
        $region65: #{rc_embed_forward.3} parent=63 // pred_check
          %p1161 = pneg %p238
        $region66: #{rc_embed_forward.3} parent=63 // pred_check_branch
          %1163 = sbr.rel (%p1161) target = $region68
        $region67: #{rc_embed_forward.3} parent=63 // pred_region
          %s1164 = sand.u32 %s223, 1
          %s1165 = scalar_lea.sflag [#allocation4], %s1164
          %s1166 = sand.u32 %s223, 1
          %s1167 = smul.addr %s1166, 128
          %s1168 = scalar_lea.vmem [#allocation7], %s1167
          %1169 = dma.done %s1165, 2048
        $region68: #{rc_embed_forward.3} parent=63 // pred_fallthru
          _
      $region64: #{rc_embed_forward.3} parent=5 // pred_fallthru
        _
    $region6: #{rc_embed_forward.3} parent=1 // loop_footer
      %s26 = sadd.s32 1, %s22
    $region7: #{rc_embed_forward.3} parent=1 // loop_footer_branch
      %21 = sbr.rel target = $region3
    $region8: #{rc_embed_forward.3} parent=1 // loop_exit
      _
    %1170 = vsyncpa [#allocation3], 1
    %s1171 = scalar_lea.sflag [#allocation3], 1
    %1172 = vsyncpa %s1171, 1
    %1173 = vsyncpa [#allocation6], 1
    %s1174 = scalar_lea.sflag [#allocation6], 1
    %1175 = vsyncpa %s1174, 1
    %1176 = vsyncpa [#allocation4], 1
    %s1177 = scalar_lea.sflag [#allocation4], 1
    %1178 = vsyncpa %s1177, 1

</llo_original>
